<compile_context>
chip_gen: v5e
topology: v5e:2x2
jax: 0.10.0
libtpu: 0.0.40
codegen_flags: <defaults>
</compile_context>

<pallas_src>
import functools
import math

import jax
import jax.numpy as jnp
from jax.experimental import pallas as pl
from jax.experimental.pallas import tpu as pltpu


def _round_up(x, m):
    return (x + m - 1) // m * m


def _device_kind():
    try:
        return jax.devices()[0].device_kind.lower()
    except Exception:
        return ""


# ----------------------------------------------------------------------------
# Pallas kernel: masked single-head attention + bmm with ph_encoder_out.
# Grid = (batch, mel_outer_split, mel_tile); the last axis is "arbitrary" so
# the cached K projection in VMEM scratch stays valid across its steps.
# ----------------------------------------------------------------------------
def _wse_attn_kernel(mel_ids_ref, ph_ids_ref, src_mask_ref, spk_k_ref,
                     ph_out_ref, enc_pos_ref, dec_pos_ref,
                     wqs_ref, wp1k_ref, wp2k_ref,
                     x_ref, w_ref, m_ref, *, exp_dtype):
    # ---- once per (batch, outer mel split): build M = Wq_scaled @ K^T -------
    @pl.when(pl.program_id(2) == 0)
    def _build_k():
        ph_out = ph_out_ref[0]      # [Tx, H] bf16  ph_encoder_out (src-masked)
        enc_pos = enc_pos_ref[0]    # [Tx, H] bf16

        # k = enc_pos_proj(cat([ph_inp, enc_pos], -1)) @ Wk, with Wp@Wk folded.
        #   ph_inp = ph_out + src_mask * spk  -> rank-1 spk correction.
        #   b_proj @ Wk is constant across Tx -> cancels in the row softmax.
        k = (jnp.dot(ph_out, wp1k_ref[...], preferred_element_type=jnp.float32)
             + jnp.dot(enc_pos, wp2k_ref[...], preferred_element_type=jnp.float32)
             + src_mask_ref[0] * spk_k_ref[0])                   # [Tx, H] f32

        # Fold the (scaled) q projection too: logits = dec_pos @ (Wqs @ K^T).
        m = jax.lax.dot_general(wqs_ref[...], k.astype(jnp.bfloat16),
                                (((1,), (1,)), ((), ())),
                                preferred_element_type=jnp.float32)   # [H, Tx]
        m_ref[...] = m.astype(m_ref.dtype)

    # ---- per mel tile --------------------------------------------------------
    logits = jnp.dot(dec_pos_ref[0], m_ref[...],
                     preferred_element_type=jnp.float32)           # [TM, Tx] f32

    # dec_word_mask rebuilt in-kernel: (mel2word == ph2word) via VPU compare.
    mask = mel_ids_ref[0] == ph_ids_ref[0]        # [TM,1] vs [1,Tx] -> [TM,Tx]
    logits = jnp.where(mask, logits, logits - 1e9)   # == logits + (1-m)*(-1e9)

    # softmax: exp in bf16 on v6e/v7x, f32 elsewhere; sum/normalize in f32.
    logits = logits - jnp.max(logits, axis=-1, keepdims=True)
    p = jnp.exp(logits.astype(exp_dtype))
    denom = jnp.sum(p.astype(jnp.float32), axis=-1, keepdims=True)
    w = p.astype(jnp.float32) * pl.reciprocal(denom, approx=True)
    w_bf = w.astype(jnp.bfloat16)

    # x = bmm(weight, ph_encoder_out): bf16 operands, f32 accumulation.
    x = jnp.dot(w_bf, ph_out_ref[0], preferred_element_type=jnp.float32)

    x_ref[0] = x.astype(x_ref.dtype)
    w_ref[0] = w_bf.astype(w_ref.dtype)


def word_score_attention(ph_out, enc_pos, dec_pos, mel2word, ph2word,
                         src_nonpadding, spk_embed, wqs_t, wp1k, wp2k):
    """Fused masked attention + bmm.

    ph_out/enc_pos: [B, Tx, H]; dec_pos: [B, Tm, H];
    mel2word: [B, Tm] int; ph2word: [B, Tx] int; src_nonpadding: [B, Tx, 1];
    spk_embed: [B, 1, H].  Weights are pre-folded/transposed to [in, out] bf16.
    Returns (x [B, Tm, H] f32, attn_weight [B, Tm, Tx] bf16).
    """
    B, Tm, H = dec_pos.shape
    Tx = ph_out.shape[1]

    kind = _device_kind()
    # bf16 exp only on chips with a bf16 EUP; harmless (f32) fallback elsewhere.
    exp_dtype = jnp.bfloat16 if ("v6" in kind or "v7" in kind or "7x" in kind) \
        else jnp.float32
    tm_cap = 256 if ("v7" in kind or "7x" in kind) else 512

    # Lane-dense attn-weight output: pad Tx to a multiple of 128.
    Tx_p = _round_up(max(Tx, 128), 128)
    # Mel tile: multiple of 16 (bf16 sublane packing); cap per generation.
    TM = tm_cap if Tm >= tm_cap else _round_up(Tm, 16)
    n_tiles = (Tm + TM - 1) // TM
    n_outer = 2 if n_tiles >= 2 else 1        # v7x: keep both TCs busy
    n_inner = (n_tiles + n_outer - 1) // n_outer
    Tm_p = n_outer * n_inner * TM

    def pad1(a, new, value=0):
        pads = [(0, 0)] * a.ndim
        pads[1] = (0, new - a.shape[1])
        return jnp.pad(a, pads, constant_values=value)

    bf16 = jnp.bfloat16
    ph_out_p = pad1(ph_out, Tx_p).astype(bf16)
    enc_pos_p = pad1(enc_pos, Tx_p).astype(bf16)
    dec_pos_p = pad1(dec_pos, Tm_p).astype(bf16)
    # Padded text columns get word-id -1 (never matches -> zero softmax mass),
    # padded mel rows get -2 (results are sliced off below).
    ph_ids = pad1(ph2word.astype(jnp.int32), Tx_p, value=-1)[:, None, :]    # [B,1,Tx_p]
    mel_ids = pad1(mel2word.astype(jnp.int32), Tm_p, value=-2)[:, :, None]  # [B,Tm_p,1]
    src_mask_p = pad1(src_nonpadding.astype(jnp.float32), Tx_p)             # [B,Tx_p,1]

    # Rank-1 speaker term: spk @ Wp1k (spk_embed is [B, 1, H]).
    spk_k = jnp.einsum("bih,hk->bik", spk_embed.astype(jnp.float32),
                       wp1k.astype(jnp.float32))                            # [B,1,H]

    grid = (B, n_outer, n_inner)

    def mel_map(b, o, i):
        return (b, o * n_inner + i, 0)

    def const_b(b, o, i):
        return (b, 0, 0)

    def wmap(b, o, i):
        return (0, 0)

    x, w = pl.pallas_call(
        functools.partial(_wse_attn_kernel, exp_dtype=exp_dtype),
        grid=grid,
        in_specs=[
            pl.BlockSpec((1, TM, 1), mel_map),        # mel word ids
            pl.BlockSpec((1, 1, Tx_p), const_b),      # ph word ids (row form)
            pl.BlockSpec((1, Tx_p, 1), const_b),      # src nonpadding (column)
            pl.BlockSpec((1, 1, H), const_b),         # spk @ Wp1k
            pl.BlockSpec((1, Tx_p, H), const_b),      # ph_encoder_out
            pl.BlockSpec((1, Tx_p, H), const_b),      # enc_pos
            pl.BlockSpec((1, TM, H), mel_map),        # dec_pos
            pl.BlockSpec((H, H), wmap),               # wqs_t (q-scale folded)
            pl.BlockSpec((H, H), wmap),               # wp1k
            pl.BlockSpec((H, H), wmap),               # wp2k
        ],
        out_specs=(pl.BlockSpec((1, TM, H), mel_map),
                   pl.BlockSpec((1, TM, Tx_p), mel_map)),
        out_shape=(jax.ShapeDtypeStruct((B, Tm_p, H), jnp.float32),
                   jax.ShapeDtypeStruct((B, Tm_p, Tx_p), jnp.bfloat16)),
        scratch_shapes=[pltpu.VMEM((H, Tx_p), jnp.bfloat16)],   # cached Wqs@K^T
        compiler_params=pltpu.CompilerParams(
            dimension_semantics=("parallel", "parallel", "arbitrary"),
            vmem_limit_bytes=48 * 1024 * 1024),
    )(mel_ids, ph_ids, src_mask_p, spk_k, ph_out_p, enc_pos_p, dec_pos_p,
      wqs_t, wp1k, wp2k)

    return x[:, :Tm, :], w[:, :Tm, :Tx]


# ----------------------------------------------------------------------------
# Plain-JAX glue (masks, positional embeddings, embedding lookup)
# ----------------------------------------------------------------------------
def build_word_mask(x2word, y2word):
    # (x2word[:, :, None] == y2word[:, None, :]).long()
    return (x2word[:, :, None] == y2word[:, None, :]).astype(jnp.float32)


def sinusoidal_pos_emb(x, dim):
    half_dim = dim // 2
    scale = math.log(10000.0) / (half_dim - 1)
    freqs = jnp.exp(jnp.arange(half_dim, dtype=jnp.float32) * -scale)
    emb = x[:, :, None] * freqs[None, None, :]
    return jnp.concatenate([jnp.sin(emb), jnp.cos(emb)], axis=-1)


def build_pos_embed(word2word, x2word, hidden_size):
    x_pos = build_word_mask(word2word, x2word)                      # [B, W, T]
    denom = jnp.maximum(x_pos.sum(-1), 1.0)[..., None]              # clamp(min=1)
    x_pos = (jnp.cumsum(x_pos, axis=-1) / denom * x_pos).sum(1)     # [B, T]
    return sinusoidal_pos_emb(x_pos, hidden_size)                   # [B, T, H]


def word_score_encoder_forward(params, txt_tokens, ph2word, word_len,
                               mel2word, spk_embed):
    H = params["emb"].shape[-1]

    word2word = jnp.arange(word_len, dtype=jnp.int32)[None, :] + 1   # [1, W]
    src_nonpadding = (txt_tokens > 0).astype(jnp.float32)[:, :, None]
    tgt_nonpadding = (mel2word > 0).astype(jnp.float32)[:, :, None]

    # TODO(synk): FS_ENCODERS[...] (FastSpeech Transformer phoneme encoder) is
    # not provided in the reference; modelled here as an embedding lookup.
    ph_encoder_out = params["emb"][txt_tokens] * src_nonpadding      # [B, Tx, H]

    enc_pos = build_pos_embed(word2word, ph2word, H)                 # [B, Tx, H]
    dec_pos = build_pos_embed(word2word, mel2word, H)                # [B, Tm, H]

    x, weight = word_score_attention(
        ph_encoder_out, enc_pos, dec_pos, mel2word, ph2word,
        src_nonpadding, spk_embed,
        params["wqs_t"], params["wp1k"], params["wp2k"])

    return {
        "ph_encoder_out": ph_encoder_out,
        "attn": weight,            # bf16 (upcast in caller only if needed)
        "decoder_inp": x,
        "x_mask": tgt_nonpadding,
    }


# ----------------------------------------------------------------------------
# Deterministic parameter init (with weight folding) + example run
# ----------------------------------------------------------------------------
def init_params(key, dict_size, hidden_size):
    ks = jax.random.split(key, 5)
    H = hidden_size
    emb = jax.random.normal(ks[0], (dict_size, H), jnp.float32) * 0.1
    # nn.Linear(2H, H): weight [H, 2H], applied as x @ W^T; split ph/pos halves.
    w_proj = jax.random.normal(ks[1], (H, 2 * H), jnp.float32) * (1.0 / math.sqrt(2 * H))
    w_q = jax.random.normal(ks[3], (H, H), jnp.float32) * (1.0 / math.sqrt(H))
    w_k = jax.random.normal(ks[4], (H, H), jnp.float32) * (1.0 / math.sqrt(H))

    scaling = float(H) ** -0.5
    wp1_t = jnp.transpose(w_proj[:, :H])      # [H_in, H_out]
    wp2_t = jnp.transpose(w_proj[:, H:])
    wq_t = jnp.transpose(w_q)
    wk_t = jnp.transpose(w_k)

    # The enc_pos_proj bias (b_proj @ Wk) is constant across the text axis and
    # cancels exactly in the row softmax -> intentionally not materialized.
    return {
        "emb": emb,
        "wqs_t": (wq_t * scaling).astype(jnp.bfloat16),   # q-scaling folded
        "wp1k": jnp.dot(wp1_t, wk_t).astype(jnp.bfloat16),  # enc_pos_proj@Wk fold
        "wp2k": jnp.dot(wp2_t, wk_t).astype(jnp.bfloat16),
    }


if __name__ == "__main__":
    B, T_TXT, T_MEL, WORD_LEN, HIDDEN, DICT = 2, 8, 16, 4, 64, 32

    key = jax.random.PRNGKey(0)
    k_param, k_tok, k_spk = jax.random.split(key, 3)

    params = init_params(k_param, DICT, HIDDEN)

    # phone -> word and mel-frame -> word maps (1-based, 0 = padding)
    ph2word = jnp.array([[1, 1, 2, 2, 3, 3, 4, 0],
                         [1, 2, 2, 3, 3, 4, 0, 0]], dtype=jnp.int32)      # [B, T_txt]
    mel2word = jnp.array([[1, 1, 1, 2, 2, 2, 2, 3, 3, 3, 4, 4, 4, 4, 0, 0],
                          [1, 1, 2, 2, 2, 3, 3, 3, 3, 4, 4, 4, 0, 0, 0, 0]],
                         dtype=jnp.int32)                                  # [B, T_mel]

    txt_tokens = jax.random.randint(k_tok, (B, T_TXT), 1, DICT, dtype=jnp.int32)
    txt_tokens = jnp.where(ph2word > 0, txt_tokens, 0)                     # pad tokens

    spk_embed = jax.random.normal(k_spk, (B, 1, HIDDEN), jnp.float32) * 0.1

    ret = word_score_encoder_forward(params, txt_tokens, ph2word, WORD_LEN,
                                     mel2word, spk_embed)
    jax.block_until_ready(ret)

    assert ret["decoder_inp"].shape == (B, T_MEL, HIDDEN)
    assert ret["attn"].shape == (B, T_MEL, T_TXT)
    assert ret["x_mask"].shape == (B, T_MEL, 1)
    assert ret["ph_encoder_out"].shape == (B, T_TXT, HIDDEN)

    print("KERNEL_OK")
</pallas_src>

<mosaic_0001>
module attributes {stable_mosaic.version = 11 : i64} {
  func.func @_wse_attn_kernel(%arg0: i32, %arg1: i32, %arg2: i32, %arg3: memref<1x16x1xi32, #tpu.memory_space<vmem>>, %arg4: memref<1x1x128xi32, #tpu.memory_space<vmem>>, %arg5: memref<1x128x1xf32, #tpu.memory_space<vmem>>, %arg6: memref<1x1x64xf32, #tpu.memory_space<vmem>>, %arg7: memref<1x128x64xbf16, #tpu.memory_space<vmem>>, %arg8: memref<1x128x64xbf16, #tpu.memory_space<vmem>>, %arg9: memref<1x16x64xbf16, #tpu.memory_space<vmem>>, %arg10: memref<64x64xbf16, #tpu.memory_space<vmem>>, %arg11: memref<64x64xbf16, #tpu.memory_space<vmem>>, %arg12: memref<64x64xbf16, #tpu.memory_space<vmem>>, %arg13: memref<1x16x64xf32, #tpu.memory_space<vmem>>, %arg14: memref<1x16x128xbf16, #tpu.memory_space<vmem>>, %arg15: memref<64x128xbf16, #tpu.memory_space<vmem>>) attributes {dimension_semantics = [#tpu.dimension_semantics<parallel>, #tpu.dimension_semantics<parallel>, #tpu.dimension_semantics<arbitrary>], iteration_bounds = array<i64: 2, 1, 1>, scalar_prefetch = 0 : i64, scratch_operands = 1 : i64, tpu.core_type = #tpu.core_type<tc>, window_params = [{transform_indices = @transform_0, window_bounds = array<i64: 1, 16, 1>}, {transform_indices = @transform_1, window_bounds = array<i64: 1, 1, 128>}, {transform_indices = @transform_2, window_bounds = array<i64: 1, 128, 1>}, {transform_indices = @transform_3, window_bounds = array<i64: 1, 1, 64>}, {transform_indices = @transform_4, window_bounds = array<i64: 1, 128, 64>}, {transform_indices = @transform_5, window_bounds = array<i64: 1, 128, 64>}, {transform_indices = @transform_6, window_bounds = array<i64: 1, 16, 64>}, {pipeline_mode = #tpu.pipeline_mode<synchronous>, transform_indices = @transform_7, window_bounds = array<i64: 64, 64>}, {pipeline_mode = #tpu.pipeline_mode<synchronous>, transform_indices = @transform_8, window_bounds = array<i64: 64, 64>}, {pipeline_mode = #tpu.pipeline_mode<synchronous>, transform_indices = @transform_9, window_bounds = array<i64: 64, 64>}, {transform_indices = @transform_10, window_bounds = array<i64: 1, 16, 64>}, {transform_indices = @transform_11, window_bounds = array<i64: 1, 16, 128>}]} {
    %c0_i32 = arith.constant 0 : i32
    %0 = arith.cmpi eq, %arg2, %c0_i32 : i32
    %1 = arith.extui %0 : i1 to i32
    %c0_i32_0 = arith.constant 0 : i32
    %2 = arith.cmpi ne, %1, %c0_i32_0 : i32
    scf.if %2 {
      %c0_24 = arith.constant 0 : index
      %c0_25 = arith.constant 0 : index
      %c0_26 = arith.constant 0 : index
      %37 = vector.load %arg7[%c0_24, %c0_25, %c0_26] : memref<1x128x64xbf16, #tpu.memory_space<vmem>>, vector<1x128x64xbf16>
      %38 = vector.shape_cast %37 : vector<1x128x64xbf16> to vector<128x64xbf16>
      %c0_27 = arith.constant 0 : index
      %c0_28 = arith.constant 0 : index
      %c0_29 = arith.constant 0 : index
      %39 = vector.load %arg8[%c0_27, %c0_28, %c0_29] : memref<1x128x64xbf16, #tpu.memory_space<vmem>>, vector<1x128x64xbf16>
      %40 = vector.shape_cast %39 : vector<1x128x64xbf16> to vector<128x64xbf16>
      %c0_30 = arith.constant 0 : index
      %c0_31 = arith.constant 0 : index
      %41 = vector.load %arg11[%c0_30, %c0_31] : memref<64x64xbf16, #tpu.memory_space<vmem>>, vector<64x64xbf16>
      %cst_32 = arith.constant dense<0.000000e+00> : vector<128x64xf32>
      %42 = tpu.matmul %38, %41, %cst_32 {dimension_numbers = #tpu.dot_dimension_numbers<[1], [0], [0], [1], [0, 0, 1, 1], [], []>} : vector<128x64xbf16>, vector<64x64xbf16>, vector<128x64xf32> -> vector<128x64xf32>
      %c0_33 = arith.constant 0 : index
      %c0_34 = arith.constant 0 : index
      %43 = vector.load %arg12[%c0_33, %c0_34] : memref<64x64xbf16, #tpu.memory_space<vmem>>, vector<64x64xbf16>
      %cst_35 = arith.constant dense<0.000000e+00> : vector<128x64xf32>
      %44 = tpu.matmul %40, %43, %cst_35 {dimension_numbers = #tpu.dot_dimension_numbers<[1], [0], [0], [1], [0, 0, 1, 1], [], []>} : vector<128x64xbf16>, vector<64x64xbf16>, vector<128x64xf32> -> vector<128x64xf32>
      %45 = arith.addf %42, %44 : vector<128x64xf32>
      %c0_36 = arith.constant 0 : index
      %c0_37 = arith.constant 0 : index
      %c0_38 = arith.constant 0 : index
      %46 = vector.load %arg5[%c0_36, %c0_37, %c0_38] : memref<1x128x1xf32, #tpu.memory_space<vmem>>, vector<1x128x1xf32>
      %47 = vector.shape_cast %46 : vector<1x128x1xf32> to vector<128x1xf32>
      %c0_39 = arith.constant 0 : index
      %c0_40 = arith.constant 0 : index
      %c0_41 = arith.constant 0 : index
      %48 = vector.load %arg6[%c0_39, %c0_40, %c0_41] : memref<1x1x64xf32, #tpu.memory_space<vmem>>, vector<1x1x64xf32>
      %49 = vector.shape_cast %48 : vector<1x1x64xf32> to vector<1x64xf32>
      %50 = vector.broadcast %47 : vector<128x1xf32> to vector<128x64xf32>
      %51 = vector.broadcast %49 : vector<1x64xf32> to vector<128x64xf32>
      %52 = arith.mulf %50, %51 : vector<128x64xf32>
      %53 = arith.addf %45, %52 : vector<128x64xf32>
      %c0_42 = arith.constant 0 : index
      %c0_43 = arith.constant 0 : index
      %54 = vector.load %arg10[%c0_42, %c0_43] : memref<64x64xbf16, #tpu.memory_space<vmem>>, vector<64x64xbf16>
      %55 = arith.truncf %53 : vector<128x64xf32> to vector<128x64xbf16>
      %cst_44 = arith.constant dense<0.000000e+00> : vector<64x128xf32>
      %56 = tpu.matmul %54, %55, %cst_44 {dimension_numbers = #tpu.dot_dimension_numbers<[1], [1], [0], [0], [0, 0, 1, 0], [], []>} : vector<64x64xbf16>, vector<128x64xbf16>, vector<64x128xf32> -> vector<64x128xf32>
      %57 = arith.truncf %56 : vector<64x128xf32> to vector<64x128xbf16>
      %c0_45 = arith.constant 0 : index
      %c0_46 = arith.constant 0 : index
      %58 = vector.load %arg15[%c0_45, %c0_46] : memref<64x128xbf16, #tpu.memory_space<vmem>>, vector<64x128xbf16>
      tpu.vector_store %arg15[%c0_45, %c0_46], %57 {strides = array<i32>} : memref<64x128xbf16, #tpu.memory_space<vmem>>, vector<64x128xbf16>,
    } else {
    }
    %c0 = arith.constant 0 : index
    %c0_1 = arith.constant 0 : index
    %c0_2 = arith.constant 0 : index
    %3 = vector.load %arg9[%c0, %c0_1, %c0_2] : memref<1x16x64xbf16, #tpu.memory_space<vmem>>, vector<1x16x64xbf16>
    %4 = vector.shape_cast %3 : vector<1x16x64xbf16> to vector<16x64xbf16>
    %c0_3 = arith.constant 0 : index
    %c0_4 = arith.constant 0 : index
    %5 = vector.load %arg15[%c0_3, %c0_4] : memref<64x128xbf16, #tpu.memory_space<vmem>>, vector<64x128xbf16>
    %cst = arith.constant dense<0.000000e+00> : vector<16x128xf32>
    %6 = tpu.matmul %4, %5, %cst {dimension_numbers = #tpu.dot_dimension_numbers<[1], [0], [0], [1], [0, 0, 1, 1], [], []>} : vector<16x64xbf16>, vector<64x128xbf16>, vector<16x128xf32> -> vector<16x128xf32>
    %c0_5 = arith.constant 0 : index
    %c0_6 = arith.constant 0 : index
    %c0_7 = arith.constant 0 : index
    %7 = vector.load %arg3[%c0_5, %c0_6, %c0_7] : memref<1x16x1xi32, #tpu.memory_space<vmem>>, vector<1x16x1xi32>
    %8 = vector.shape_cast %7 : vector<1x16x1xi32> to vector<16x1xi32>
    %c0_8 = arith.constant 0 : index
    %c0_9 = arith.constant 0 : index
    %c0_10 = arith.constant 0 : index
    %9 = vector.load %arg4[%c0_8, %c0_9, %c0_10] : memref<1x1x128xi32, #tpu.memory_space<vmem>>, vector<1x1x128xi32>
    %10 = vector.shape_cast %9 : vector<1x1x128xi32> to vector<1x128xi32>
    %11 = vector.broadcast %8 : vector<16x1xi32> to vector<16x128xi32>
    %12 = vector.broadcast %10 : vector<1x128xi32> to vector<16x128xi32>
    %13 = arith.cmpi eq, %11, %12 : vector<16x128xi32>
    %cst_11 = arith.constant 1.000000e+09 : f32
    %14 = vector.broadcast %cst_11 : f32 to vector<16x128xf32>
    %15 = arith.subf %6, %14 : vector<16x128xf32>
    %16 = arith.select %13, %6, %15 : vector<16x128xi1>, vector<16x128xf32>
    %cst_12 = arith.constant dense<0xFF800000> : vector<16xf32>
    %17 = vector.multi_reduction <maximumf>, %16, %cst_12 [1] : vector<16x128xf32> to vector<16xf32>
    %18 = vector.shape_cast %17 : vector<16xf32> to vector<16x1xf32>
    %19 = vector.broadcast %18 : vector<16x1xf32> to vector<16x128xf32>
    %20 = arith.subf %16, %19 : vector<16x128xf32>
    %21 = math.exp %20 : vector<16x128xf32>
    %cst_13 = arith.constant dense<0.000000e+00> : vector<16xf32>
    %22 = vector.multi_reduction <add>, %21, %cst_13 [1] : vector<16x128xf32> to vector<16xf32>
    %23 = vector.shape_cast %22 : vector<16xf32> to vector<16x1xf32>
    %24 = tpu.reciprocal %23 {approx = true} : vector<16x1xf32> -> vector<16x1xf32>
    %25 = vector.broadcast %24 : vector<16x1xf32> to vector<16x128xf32>
    %26 = arith.mulf %21, %25 : vector<16x128xf32>
    %27 = arith.truncf %26 : vector<16x128xf32> to vector<16x128xbf16>
    %c0_14 = arith.constant 0 : index
    %c0_15 = arith.constant 0 : index
    %c0_16 = arith.constant 0 : index
    %28 = vector.load %arg7[%c0_14, %c0_15, %c0_16] : memref<1x128x64xbf16, #tpu.memory_space<vmem>>, vector<1x128x64xbf16>
    %29 = vector.shape_cast %28 : vector<1x128x64xbf16> to vector<128x64xbf16>
    %cst_17 = arith.constant dense<0.000000e+00> : vector<16x64xf32>
    %30 = tpu.matmul %27, %29, %cst_17 {dimension_numbers = #tpu.dot_dimension_numbers<[1], [0], [0], [1], [0, 0, 1, 1], [], []>} : vector<16x128xbf16>, vector<128x64xbf16>, vector<16x64xf32> -> vector<16x64xf32>
    %c0_18 = arith.constant 0 : index
    %c0_19 = arith.constant 0 : index
    %c0_20 = arith.constant 0 : index
    %31 = vector.load %arg13[%c0_18, %c0_19, %c0_20] : memref<1x16x64xf32, #tpu.memory_space<vmem>>, vector<1x16x64xf32>
    %32 = vector.shape_cast %31 : vector<1x16x64xf32> to vector<16x64xf32>
    %33 = vector.shape_cast %30 : vector<16x64xf32> to vector<1x16x64xf32>
    tpu.vector_store %arg13[%c0_18, %c0_19, %c0_20], %33 {strides = array<i32>} : memref<1x16x64xf32, #tpu.memory_space<vmem>>, vector<1x16x64xf32>,
    %c0_21 = arith.constant 0 : index
    %c0_22 = arith.constant 0 : index
    %c0_23 = arith.constant 0 : index
    %34 = vector.load %arg14[%c0_21, %c0_22, %c0_23] : memref<1x16x128xbf16, #tpu.memory_space<vmem>>, vector<1x16x128xbf16>
    %35 = vector.shape_cast %34 : vector<1x16x128xbf16> to vector<16x128xbf16>
    %36 = vector.shape_cast %27 : vector<16x128xbf16> to vector<1x16x128xbf16>
    tpu.vector_store %arg14[%c0_21, %c0_22, %c0_23], %36 {strides = array<i32>} : memref<1x16x128xbf16, #tpu.memory_space<vmem>>, vector<1x16x128xbf16>,
    return
  }
  func.func @transform_0(%arg0: i32, %arg1: i32, %arg2: i32) -> (i32, i32, i32) {
    %c1_i32 = arith.constant 1 : i32
    %0 = arith.muli %arg1, %c1_i32 : i32
    %1 = arith.addi %0, %arg2 : i32
    %c0_i32 = arith.constant 0 : i32
    %c0_i32_0 = arith.constant 0 : i32
    return %arg0, %1, %c0_i32 : i32, i32, i32
  }
  func.func @transform_1(%arg0: i32, %arg1: i32, %arg2: i32) -> (i32, i32, i32) {
    %c0_i32 = arith.constant 0 : i32
    %c0_i32_0 = arith.constant 0 : i32
    %c0_i32_1 = arith.constant 0 : i32
    return %arg0, %c0_i32, %c0_i32_0 : i32, i32, i32
  }
  func.func @transform_2(%arg0: i32, %arg1: i32, %arg2: i32) -> (i32, i32, i32) {
    %c0_i32 = arith.constant 0 : i32
    %c0_i32_0 = arith.constant 0 : i32
    %c0_i32_1 = arith.constant 0 : i32
    return %arg0, %c0_i32, %c0_i32_0 : i32, i32, i32
  }
  func.func @transform_3(%arg0: i32, %arg1: i32, %arg2: i32) -> (i32, i32, i32) {
    %c0_i32 = arith.constant 0 : i32
    %c0_i32_0 = arith.constant 0 : i32
    %c0_i32_1 = arith.constant 0 : i32
    return %arg0, %c0_i32, %c0_i32_0 : i32, i32, i32
  }
  func.func @transform_4(%arg0: i32, %arg1: i32, %arg2: i32) -> (i32, i32, i32) {
    %c0_i32 = arith.constant 0 : i32
    %c0_i32_0 = arith.constant 0 : i32
    %c0_i32_1 = arith.constant 0 : i32
    return %arg0, %c0_i32, %c0_i32_0 : i32, i32, i32
  }
  func.func @transform_5(%arg0: i32, %arg1: i32, %arg2: i32) -> (i32, i32, i32) {
    %c0_i32 = arith.constant 0 : i32
    %c0_i32_0 = arith.constant 0 : i32
    %c0_i32_1 = arith.constant 0 : i32
    return %arg0, %c0_i32, %c0_i32_0 : i32, i32, i32
  }
  func.func @transform_6(%arg0: i32, %arg1: i32, %arg2: i32) -> (i32, i32, i32) {
    %c1_i32 = arith.constant 1 : i32
    %0 = arith.muli %arg1, %c1_i32 : i32
    %1 = arith.addi %0, %arg2 : i32
    %c0_i32 = arith.constant 0 : i32
    %c0_i32_0 = arith.constant 0 : i32
    return %arg0, %1, %c0_i32 : i32, i32, i32
  }
  func.func @transform_7(%arg0: i32, %arg1: i32, %arg2: i32) -> (i32, i32) {
    %c0_i32 = arith.constant 0 : i32
    %c0_i32_0 = arith.constant 0 : i32
    %c0_i32_1 = arith.constant 0 : i32
    return %c0_i32, %c0_i32_0 : i32, i32
  }
  func.func @transform_8(%arg0: i32, %arg1: i32, %arg2: i32) -> (i32, i32) {
    %c0_i32 = arith.constant 0 : i32
    %c0_i32_0 = arith.constant 0 : i32
    %c0_i32_1 = arith.constant 0 : i32
    return %c0_i32, %c0_i32_0 : i32, i32
  }
  func.func @transform_9(%arg0: i32, %arg1: i32, %arg2: i32) -> (i32, i32) {
    %c0_i32 = arith.constant 0 : i32
    %c0_i32_0 = arith.constant 0 : i32
    %c0_i32_1 = arith.constant 0 : i32
    return %c0_i32, %c0_i32_0 : i32, i32
  }
  func.func @transform_10(%arg0: i32, %arg1: i32, %arg2: i32) -> (i32, i32, i32) {
    %c1_i32 = arith.constant 1 : i32
    %0 = arith.muli %arg1, %c1_i32 : i32
    %1 = arith.addi %0, %arg2 : i32
    %c0_i32 = arith.constant 0 : i32
    %c0_i32_0 = arith.constant 0 : i32
    return %arg0, %1, %c0_i32 : i32, i32, i32
  }
  func.func @transform_11(%arg0: i32, %arg1: i32, %arg2: i32) -> (i32, i32, i32) {
    %c1_i32 = arith.constant 1 : i32
    %0 = arith.muli %arg1, %c1_i32 : i32
    %1 = arith.addi %0, %arg2 : i32
    %c0_i32 = arith.constant 0 : i32
    %c0_i32_0 = arith.constant 0 : i32
    return %arg0, %1, %c0_i32 : i32, i32, i32
  }
}

</mosaic_0001>

<llo_original>
// kernel: tpu_custom_call.1
$region0: #{tpu_custom_call.1}
  #allocation0 [shape = 'u32[]', space=smem, size = 0x4, offset = 0x4, fixed_abs, tag = 'smem constant byte address 0x4 - core index']
  #allocation1 [shape = 'u32[72,128]{1,0:T(1,128)}', space=vmem, size = 0x9000, scoped, tag = 'internal scratch']
  #allocation2 [shape = 'bf16[64,128]{1,0:T(8,128)(2,1)}', space=vmem, size = 0x4000, scoped, tag = 'scratch operand']
  %s0 = inlined_call_operand.vmem [shape: s32[2,16,1], index: 0, kind: input, shape index: {}]
  %s1 = inlined_call_operand.vmem [shape: s32[2,1,128], index: 1, kind: input, shape index: {}]
  %s2 = inlined_call_operand.vmem [shape: f32[2,128,1], index: 2, kind: input, shape index: {}]
  %s3 = inlined_call_operand.vmem [shape: f32[2,1,64], index: 3, kind: input, shape index: {}]
  %s4 = inlined_call_operand.vmem [shape: bf16[2,128,64], index: 4, kind: input, shape index: {}]
  %s5 = inlined_call_operand.vmem [shape: bf16[2,128,64], index: 5, kind: input, shape index: {}]
  %s6 = inlined_call_operand.vmem [shape: bf16[2,16,64], index: 6, kind: input, shape index: {}]
  %s7 = inlined_call_operand.vmem [shape: bf16[64,64], index: 7, kind: input, shape index: {}]
  %s8 = inlined_call_operand.vmem [shape: bf16[64,64], index: 8, kind: input, shape index: {}]
  %s9 = inlined_call_operand.vmem [shape: bf16[64,64], index: 9, kind: input, shape index: {}]
  %s10 = inlined_call_operand.hbm [shape: f32[2,16,64], index: 10, kind: output, shape index: {0}]
  %s11 = inlined_call_operand.hbm [shape: bf16[2,16,128], index: 11, kind: output, shape index: {1}]
  %12 = xla_tuple %s10, %s11
  %s13 = sld [smem:[#allocation0]]
  $region85: #{tpu_custom_call.1} parent=0
    _
  %s15 = ssub.s32 1, %s13
  %s16 = scalar_select 0, %s15, %s13
  $region1: #{tpu_custom_call.1} parent=0
    #allocation3 [shape = 'u8[16384]{0}', space=vmem, size = 0x4000, scoped, tag = 'output window, operand 0']
    #allocation4 [shape = 's32[2]{0}', space=sflag, size = 0x8, scoped, tag = 'scoped memory for tpu_custom_call.1']
    #allocation5 [shape = 'u8[8192]{0}', space=vmem, size = 0x2000, scoped, tag = 'output window, operand 1']
    #allocation6 [shape = 's32[2]{0}', space=sflag, size = 0x8, scoped, tag = 'scoped memory for tpu_custom_call.1']
    %17 = vsyncpa [#allocation4], 0
    %s18 = scalar_lea.sflag [#allocation4], 1
    %19 = vsyncpa %s18, 0
    %20 = vsyncpa [#allocation6], 0
    %s21 = scalar_lea.sflag [#allocation6], 1
    %22 = vsyncpa %s21, 0
    loop: start=0, step=1, limit=4
    $region2: #{tpu_custom_call.1} parent=1 // loop_pre_header
      _
    $region3: #{tpu_custom_call.1} parent=1 // loop_header
      %s24 = sphi 0, %s28
      %p25 = scmp.ge.s32.totalorder %s24, 4
      %s31 = sphi 0, %s50
      %s32 = sphi 0, %s46
      %s33 = sphi 0, %s42
      %s34 = sphi 0, %s31
      %s35 = sphi 0, %s32
      %s36 = sphi 0, %s33
      %s37 = sphi 0, %s34
      %s38 = sphi 0, %s35
      %s39 = sphi 0, %s36
      %s57 = sphi 0, %s59
      %s60 = sphi 0, %s57
      %s61 = sphi 0, %s60
      %s77 = sphi 0, %s61
      %s83 = sphi 0, %s85
      %s86 = sphi 0, %s83
      %s87 = sphi 0, %s86
      %s103 = sphi 0, %s87
      %s109 = sphi 0, %s111
      %s112 = sphi 0, %s109
      %s113 = sphi 0, %s112
      %s129 = sphi 0, %s113
      %s135 = sphi 0, %s137
      %s138 = sphi 0, %s135
      %s139 = sphi 0, %s138
      %s155 = sphi 0, %s139
      %s161 = sphi 0, %s163
      %s164 = sphi 0, %s161
      %s165 = sphi 0, %s164
      %s181 = sphi 0, %s165
      %s187 = sphi 0, %s189
      %s190 = sphi 0, %s187
      %s191 = sphi 0, %s190
      %s207 = sphi 0, %s191
      %s217 = sphi 0, %s219
      %s220 = sphi 0, %s217
      %s221 = sphi 0, %s220
      %s237 = sphi 0, %s221
      %s241 = sphi 0, %s241
      %s243 = sphi 0, %s241
      %s244 = sphi 0, %s243
      %s258 = sphi 0, %s244
      %s262 = sphi 0, %s262
      %s264 = sphi 0, %s262
      %s265 = sphi 0, %s264
      %s279 = sphi 0, %s265
      %s283 = sphi 0, %s283
      %s285 = sphi 0, %s283
      %s286 = sphi 0, %s285
      %s300 = sphi 0, %s286
      %s310 = sphi 0, %s312
      %s313 = sphi 0, %s310
      %s314 = sphi 0, %s313
      %s330 = sphi 0, %s314
      %s340 = sphi 0, %s342
      %s343 = sphi 0, %s340
      %s344 = sphi 0, %s343
      %s360 = sphi 0, %s344
    $region4: #{tpu_custom_call.1} parent=1 // loop_header_branch
      %27 = sbr.rel (%p25) target = $region8
    $region5: #{tpu_custom_call.1} parent=1 // loop_body
      %s29 = ssub.s32 %s24, 1
      %s30 = ssub.s32 %s24, 2
      %s40 = sadd.s32 1, %s33
      %p41 = scmp.ge.s32.totalorder %s40, 1
      %s42 = scalar_select %p41, 0, %s40
      %s43 = sadd.s32 1, %s32
      %s44 = scalar_select %p41, %s43, %s32
      %p45 = scmp.ge.s32.totalorder %s44, 1
      %s46 = scalar_select %p45, 0, %s44
      %s47 = sadd.s32 1, %s31
      %s48 = scalar_select %p45, %s47, %s31
      %p49 = scmp.ge.s32.totalorder %s48, 2
      %s50 = scalar_select %p49, 0, %s48
      %s51 = sadd.s32 %s32, %s33
      %s52 = sadd.s32 %s46, %s42
      %s53 = ssub.s32 %s31, %s50
      %s54 = ssub.s32 %s51, %s52
      %s55 = sor.u32 %s53, %s54
      %p56 = scmp.eq.s32.totalorder %s55, 0
      %s58 = sadd.s32 %s57, 1
      %s59 = scalar_select %p56, %s57, %s58
      %p62 = pneg %p56
      %p63 = scmp.eq.s32.totalorder %s24, 1
      %p64 = por %p62, %p63
      %p65 = scmp.ne.s32.totalorder %s57, %s60
      %p66 = scmp.eq.s32.totalorder %s24, 0
      %p67 = por %p65, %p66
      %p68 = scmp.ne.s32.totalorder %s57, %s60
      %p69 = scmp.eq.s32.totalorder %s29, 1
      %p70 = por %p68, %p69
      %p71 = scmp.ne.s32.totalorder %s60, %s61
      %p72 = scmp.eq.s32.totalorder %s29, 0
      %p73 = por %p71, %p72
      %p74 = scmp.ne.s32.totalorder %s60, %s61
      %p75 = scmp.eq.s32.totalorder %s30, 1
      %p76 = por %p74, %p75
      %p78 = scmp.ne.s32.totalorder %s61, %s77
      %p79 = scmp.eq.s32.totalorder %s30, 0
      %p80 = por %p78, %p79
      %s81 = ssub.s32 %s31, %s50
      %p82 = scmp.eq.s32.totalorder %s81, 0
      %s84 = sadd.s32 %s83, 1
      %s85 = scalar_select %p82, %s83, %s84
      %p88 = pneg %p82
      %p89 = scmp.eq.s32.totalorder %s24, 1
      %p90 = por %p88, %p89
      %p91 = scmp.ne.s32.totalorder %s83, %s86
      %p92 = scmp.eq.s32.totalorder %s24, 0
      %p93 = por %p91, %p92
      %p94 = scmp.ne.s32.totalorder %s83, %s86
      %p95 = scmp.eq.s32.totalorder %s29, 1
      %p96 = por %p94, %p95
      %p97 = scmp.ne.s32.totalorder %s86, %s87
      %p98 = scmp.eq.s32.totalorder %s29, 0
      %p99 = por %p97, %p98
      %p100 = scmp.ne.s32.totalorder %s86, %s87
      %p101 = scmp.eq.s32.totalorder %s30, 1
      %p102 = por %p100, %p101
      %p104 = scmp.ne.s32.totalorder %s87, %s103
      %p105 = scmp.eq.s32.totalorder %s30, 0
      %p106 = por %p104, %p105
      %s107 = ssub.s32 %s31, %s50
      %p108 = scmp.eq.s32.totalorder %s107, 0
      %s110 = sadd.s32 %s109, 1
      %s111 = scalar_select %p108, %s109, %s110
      %p114 = pneg %p108
      %p115 = scmp.eq.s32.totalorder %s24, 1
      %p116 = por %p114, %p115
      %p117 = scmp.ne.s32.totalorder %s109, %s112
      %p118 = scmp.eq.s32.totalorder %s24, 0
      %p119 = por %p117, %p118
      %p120 = scmp.ne.s32.totalorder %s109, %s112
      %p121 = scmp.eq.s32.totalorder %s29, 1
      %p122 = por %p120, %p121
      %p123 = scmp.ne.s32.totalorder %s112, %s113
      %p124 = scmp.eq.s32.totalorder %s29, 0
      %p125 = por %p123, %p124
      %p126 = scmp.ne.s32.totalorder %s112, %s113
      %p127 = scmp.eq.s32.totalorder %s30, 1
      %p128 = por %p126, %p127
      %p130 = scmp.ne.s32.totalorder %s113, %s129
      %p131 = scmp.eq.s32.totalorder %s30, 0
      %p132 = por %p130, %p131
      %s133 = ssub.s32 %s31, %s50
      %p134 = scmp.eq.s32.totalorder %s133, 0
      %s136 = sadd.s32 %s135, 1
      %s137 = scalar_select %p134, %s135, %s136
      %p140 = pneg %p134
      %p141 = scmp.eq.s32.totalorder %s24, 1
      %p142 = por %p140, %p141
      %p143 = scmp.ne.s32.totalorder %s135, %s138
      %p144 = scmp.eq.s32.totalorder %s24, 0
      %p145 = por %p143, %p144
      %p146 = scmp.ne.s32.totalorder %s135, %s138
      %p147 = scmp.eq.s32.totalorder %s29, 1
      %p148 = por %p146, %p147
      %p149 = scmp.ne.s32.totalorder %s138, %s139
      %p150 = scmp.eq.s32.totalorder %s29, 0
      %p151 = por %p149, %p150
      %p152 = scmp.ne.s32.totalorder %s138, %s139
      %p153 = scmp.eq.s32.totalorder %s30, 1
      %p154 = por %p152, %p153
      %p156 = scmp.ne.s32.totalorder %s139, %s155
      %p157 = scmp.eq.s32.totalorder %s30, 0
      %p158 = por %p156, %p157
      %s159 = ssub.s32 %s31, %s50
      %p160 = scmp.eq.s32.totalorder %s159, 0
      %s162 = sadd.s32 %s161, 1
      %s163 = scalar_select %p160, %s161, %s162
      %p166 = pneg %p160
      %p167 = scmp.eq.s32.totalorder %s24, 1
      %p168 = por %p166, %p167
      %p169 = scmp.ne.s32.totalorder %s161, %s164
      %p170 = scmp.eq.s32.totalorder %s24, 0
      %p171 = por %p169, %p170
      %p172 = scmp.ne.s32.totalorder %s161, %s164
      %p173 = scmp.eq.s32.totalorder %s29, 1
      %p174 = por %p172, %p173
      %p175 = scmp.ne.s32.totalorder %s164, %s165
      %p176 = scmp.eq.s32.totalorder %s29, 0
      %p177 = por %p175, %p176
      %p178 = scmp.ne.s32.totalorder %s164, %s165
      %p179 = scmp.eq.s32.totalorder %s30, 1
      %p180 = por %p178, %p179
      %p182 = scmp.ne.s32.totalorder %s165, %s181
      %p183 = scmp.eq.s32.totalorder %s30, 0
      %p184 = por %p182, %p183
      %s185 = ssub.s32 %s31, %s50
      %p186 = scmp.eq.s32.totalorder %s185, 0
      %s188 = sadd.s32 %s187, 1
      %s189 = scalar_select %p186, %s187, %s188
      %p192 = pneg %p186
      %p193 = scmp.eq.s32.totalorder %s24, 1
      %p194 = por %p192, %p193
      %p195 = scmp.ne.s32.totalorder %s187, %s190
      %p196 = scmp.eq.s32.totalorder %s24, 0
      %p197 = por %p195, %p196
      %p198 = scmp.ne.s32.totalorder %s187, %s190
      %p199 = scmp.eq.s32.totalorder %s29, 1
      %p200 = por %p198, %p199
      %p201 = scmp.ne.s32.totalorder %s190, %s191
      %p202 = scmp.eq.s32.totalorder %s29, 0
      %p203 = por %p201, %p202
      %p204 = scmp.ne.s32.totalorder %s190, %s191
      %p205 = scmp.eq.s32.totalorder %s30, 1
      %p206 = por %p204, %p205
      %p208 = scmp.ne.s32.totalorder %s191, %s207
      %p209 = scmp.eq.s32.totalorder %s30, 0
      %p210 = por %p208, %p209
      %s211 = sadd.s32 %s32, %s33
      %s212 = sadd.s32 %s46, %s42
      %s213 = ssub.s32 %s31, %s50
      %s214 = ssub.s32 %s211, %s212
      %s215 = sor.u32 %s213, %s214
      %p216 = scmp.eq.s32.totalorder %s215, 0
      %s218 = sadd.s32 %s217, 1
      %s219 = scalar_select %p216, %s217, %s218
      %p222 = pneg %p216
      %p223 = scmp.eq.s32.totalorder %s24, 1
      %p224 = por %p222, %p223
      %p225 = scmp.ne.s32.totalorder %s217, %s220
      %p226 = scmp.eq.s32.totalorder %s24, 0
      %p227 = por %p225, %p226
      %p228 = scmp.ne.s32.totalorder %s217, %s220
      %p229 = scmp.eq.s32.totalorder %s29, 1
      %p230 = por %p228, %p229
      %p231 = scmp.ne.s32.totalorder %s220, %s221
      %p232 = scmp.eq.s32.totalorder %s29, 0
      %p233 = por %p231, %p232
      %p234 = scmp.ne.s32.totalorder %s220, %s221
      %p235 = scmp.eq.s32.totalorder %s30, 1
      %p236 = por %p234, %p235
      %p238 = scmp.ne.s32.totalorder %s221, %s237
      %p239 = scmp.eq.s32.totalorder %s30, 0
      %p240 = por %p238, %p239
      %s242 = sadd.s32 %s241, 1
      %p245 = scmp.eq.s32.totalorder %s24, 1
      %p246 = scmp.ne.s32.totalorder %s241, %s243
      %p247 = scmp.eq.s32.totalorder %s24, 0
      %p248 = por %p246, %p247
      %p249 = scmp.ne.s32.totalorder %s241, %s243
      %p250 = scmp.eq.s32.totalorder %s29, 1
      %p251 = por %p249, %p250
      %p252 = scmp.ne.s32.totalorder %s243, %s244
      %p253 = scmp.eq.s32.totalorder %s29, 0
      %p254 = por %p252, %p253
      %p255 = scmp.ne.s32.totalorder %s243, %s244
      %p256 = scmp.eq.s32.totalorder %s30, 1
      %p257 = por %p255, %p256
      %p259 = scmp.ne.s32.totalorder %s244, %s258
      %p260 = scmp.eq.s32.totalorder %s30, 0
      %p261 = por %p259, %p260
      %s263 = sadd.s32 %s262, 1
      %p266 = scmp.eq.s32.totalorder %s24, 1
      %p267 = scmp.ne.s32.totalorder %s262, %s264
      %p268 = scmp.eq.s32.totalorder %s24, 0
      %p269 = por %p267, %p268
      %p270 = scmp.ne.s32.totalorder %s262, %s264
      %p271 = scmp.eq.s32.totalorder %s29, 1
      %p272 = por %p270, %p271
      %p273 = scmp.ne.s32.totalorder %s264, %s265
      %p274 = scmp.eq.s32.totalorder %s29, 0
      %p275 = por %p273, %p274
      %p276 = scmp.ne.s32.totalorder %s264, %s265
      %p277 = scmp.eq.s32.totalorder %s30, 1
      %p278 = por %p276, %p277
      %p280 = scmp.ne.s32.totalorder %s265, %s279
      %p281 = scmp.eq.s32.totalorder %s30, 0
      %p282 = por %p280, %p281
      %s284 = sadd.s32 %s283, 1
      %p287 = scmp.eq.s32.totalorder %s24, 1
      %p288 = scmp.ne.s32.totalorder %s283, %s285
      %p289 = scmp.eq.s32.totalorder %s24, 0
      %p290 = por %p288, %p289
      %p291 = scmp.ne.s32.totalorder %s283, %s285
      %p292 = scmp.eq.s32.totalorder %s29, 1
      %p293 = por %p291, %p292
      %p294 = scmp.ne.s32.totalorder %s285, %s286
      %p295 = scmp.eq.s32.totalorder %s29, 0
      %p296 = por %p294, %p295
      %p297 = scmp.ne.s32.totalorder %s285, %s286
      %p298 = scmp.eq.s32.totalorder %s30, 1
      %p299 = por %p297, %p298
      %p301 = scmp.ne.s32.totalorder %s286, %s300
      %p302 = scmp.eq.s32.totalorder %s30, 0
      %p303 = por %p301, %p302
      %s304 = sadd.s32 %s32, %s33
      %s305 = sadd.s32 %s46, %s42
      %s306 = ssub.s32 %s31, %s50
      %s307 = ssub.s32 %s304, %s305
      %s308 = sor.u32 %s306, %s307
      %p309 = scmp.eq.s32.totalorder %s308, 0
      %s311 = sadd.s32 %s310, 1
      %s312 = scalar_select %p309, %s310, %s311
      %p315 = pneg %p309
      %p316 = scmp.eq.s32.totalorder %s24, 1
      %p317 = por %p315, %p316
      %p318 = scmp.ne.s32.totalorder %s310, %s313
      %p319 = scmp.eq.s32.totalorder %s24, 0
      %p320 = por %p318, %p319
      %p321 = scmp.ne.s32.totalorder %s310, %s313
      %p322 = scmp.eq.s32.totalorder %s29, 1
      %p323 = por %p321, %p322
      %p324 = scmp.ne.s32.totalorder %s313, %s314
      %p325 = scmp.eq.s32.totalorder %s29, 0
      %p326 = por %p324, %p325
      %p327 = scmp.ne.s32.totalorder %s313, %s314
      %p328 = scmp.eq.s32.totalorder %s30, 1
      %p329 = por %p327, %p328
      %p331 = scmp.ne.s32.totalorder %s314, %s330
      %p332 = scmp.eq.s32.totalorder %s30, 0
      %p333 = por %p331, %p332
      %s334 = sadd.s32 %s32, %s33
      %s335 = sadd.s32 %s46, %s42
      %s336 = ssub.s32 %s31, %s50
      %s337 = ssub.s32 %s334, %s335
      %s338 = sor.u32 %s336, %s337
      %p339 = scmp.eq.s32.totalorder %s338, 0
      %s341 = sadd.s32 %s340, 1
      %s342 = scalar_select %p339, %s340, %s341
      %p345 = pneg %p339
      %p346 = scmp.eq.s32.totalorder %s24, 1
      %p347 = por %p345, %p346
      %p348 = scmp.ne.s32.totalorder %s340, %s343
      %p349 = scmp.eq.s32.totalorder %s24, 0
      %p350 = por %p348, %p349
      %p351 = scmp.ne.s32.totalorder %s340, %s343
      %p352 = scmp.eq.s32.totalorder %s29, 1
      %p353 = por %p351, %p352
      %p354 = scmp.ne.s32.totalorder %s343, %s344
      %p355 = scmp.eq.s32.totalorder %s29, 0
      %p356 = por %p354, %p355
      %p357 = scmp.ne.s32.totalorder %s343, %s344
      %p358 = scmp.eq.s32.totalorder %s30, 1
      %p359 = por %p357, %p358
      %p361 = scmp.ne.s32.totalorder %s344, %s360
      %p362 = scmp.eq.s32.totalorder %s30, 0
      %p363 = por %p361, %p362
      %p364 = scmp.le.s32.totalorder 1, %s24
      %p365 = scmp.lt.s32.totalorder %s24, 3
      %p366 = pnand %p364, %p365
      %p367 = pneg %p366
      // Predicated region
      $region9: #{tpu_custom_call.1} parent=5 // pred_check
        _
      $region10: #{tpu_custom_call.1} parent=5 // pred_check_branch
        %369 = sbr.rel (%p366) target = $region12
      $region11: #{tpu_custom_call.1} parent=5 // pred_region
        %s370 = ssub.s32 %s24, 1
        // Predicated region
        $region13: #{tpu_custom_call.1} parent=11 // pred_check
          %p371 = pneg %p254
        $region14: #{tpu_custom_call.1} parent=11 // pred_check_branch
          %373 = sbr.rel (%p371) target = $region16
        $region15: #{tpu_custom_call.1} parent=11 // pred_region
          _
        $region16: #{tpu_custom_call.1} parent=11 // pred_fallthru
          _
        // Predicated region
        $region17: #{tpu_custom_call.1} parent=11 // pred_check
          %p374 = pneg %p275
        $region18: #{tpu_custom_call.1} parent=11 // pred_check_branch
          %376 = sbr.rel (%p374) target = $region20
        $region19: #{tpu_custom_call.1} parent=11 // pred_region
          _
        $region20: #{tpu_custom_call.1} parent=11 // pred_fallthru
          _
        // Predicated region
        $region21: #{tpu_custom_call.1} parent=11 // pred_check
          %p377 = pneg %p296
        $region22: #{tpu_custom_call.1} parent=11 // pred_check_branch
          %379 = sbr.rel (%p377) target = $region24
        $region23: #{tpu_custom_call.1} parent=11 // pred_region
          _
        $region24: #{tpu_custom_call.1} parent=11 // pred_fallthru
          _
      $region12: #{tpu_custom_call.1} parent=5 // pred_fallthru
        _
      %p380 = scmp.lt.s32.totalorder %s24, 2
      // Predicated region
      $region25: #{tpu_custom_call.1} parent=5 // pred_check
        %p381 = pneg %p380
      $region26: #{tpu_custom_call.1} parent=5 // pred_check_branch
        %383 = sbr.rel (%p381) target = $region28
      $region27: #{tpu_custom_call.1} parent=5 // pred_region
        // Predicated region
        $region29: #{tpu_custom_call.1} parent=27 // pred_check
          %p384 = pneg %p67
        $region30: #{tpu_custom_call.1} parent=27 // pred_check_branch
          %386 = sbr.rel (%p384) target = $region32
        $region31: #{tpu_custom_call.1} parent=27 // pred_region
          %s387 = sadd.s32 %s32, %s33
          %s388 = smul.u32 2, %s387
          %p389 = scmp.lt.s32.totalorder %s31, 1
          %s390 = scalar_select %p389, %s31, 1
          %p391 = scmp.lt.s32.totalorder %s388, 1
          %s392 = scalar_select %p391, %s388, 1
          %s393 = smul.addr %s390, 2
          %s394 = sadd.s32 %s392, %s393
          %s395 = smul.addr %s394, 8
          %s396 = scalar_lea.vmem %s0, %s395
          %s397 = sadd.s32 %s32, %s33
          %s398 = smul.u32 2, %s397
        $region32: #{tpu_custom_call.1} parent=27 // pred_fallthru
          _
        // Predicated region
        $region33: #{tpu_custom_call.1} parent=27 // pred_check
          %p399 = pneg %p93
        $region34: #{tpu_custom_call.1} parent=27 // pred_check_branch
          %401 = sbr.rel (%p399) target = $region36
        $region35: #{tpu_custom_call.1} parent=27 // pred_region
          %p402 = scmp.lt.s32.totalorder %s31, 1
          %s403 = scalar_select %p402, %s31, 1
          %s404 = scalar_lea.vmem %s1, %s403
        $region36: #{tpu_custom_call.1} parent=27 // pred_fallthru
          _
        // Predicated region
        $region37: #{tpu_custom_call.1} parent=27 // pred_check
          %p405 = pneg %p119
        $region38: #{tpu_custom_call.1} parent=27 // pred_check_branch
          %407 = sbr.rel (%p405) target = $region40
        $region39: #{tpu_custom_call.1} parent=27 // pred_region
          %p408 = scmp.lt.s32.totalorder %s31, 1
          %s409 = scalar_select %p408, %s31, 1
          %s410 = smul.addr %s409, 16
          %s411 = smul.addr %s410, 8
          %s412 = scalar_lea.vmem %s2, %s411
        $region40: #{tpu_custom_call.1} parent=27 // pred_fallthru
          _
        // Predicated region
        $region41: #{tpu_custom_call.1} parent=27 // pred_check
          %p413 = pneg %p145
        $region42: #{tpu_custom_call.1} parent=27 // pred_check_branch
          %415 = sbr.rel (%p413) target = $region44
        $region43: #{tpu_custom_call.1} parent=27 // pred_region
          %p416 = scmp.lt.s32.totalorder %s31, 1
          %s417 = scalar_select %p416, %s31, 1
          %s418 = scalar_lea.vmem %s3, %s417
        $region44: #{tpu_custom_call.1} parent=27 // pred_fallthru
          _
        // Predicated region
        $region45: #{tpu_custom_call.1} parent=27 // pred_check
          %p419 = pneg %p171
        $region46: #{tpu_custom_call.1} parent=27 // pred_check_branch
          %421 = sbr.rel (%p419) target = $region48
        $region47: #{tpu_custom_call.1} parent=27 // pred_region
          %p422 = scmp.lt.s32.totalorder %s31, 1
          %s423 = scalar_select %p422, %s31, 1
          %s424 = smul.addr %s423, 16
          %s425 = smul.addr %s424, 4
          %s426 = scalar_lea.vmem %s4, %s425
        $region48: #{tpu_custom_call.1} parent=27 // pred_fallthru
          _
        // Predicated region
        $region49: #{tpu_custom_call.1} parent=27 // pred_check
          %p427 = pneg %p197
        $region50: #{tpu_custom_call.1} parent=27 // pred_check_branch
          %429 = sbr.rel (%p427) target = $region52
        $region51: #{tpu_custom_call.1} parent=27 // pred_region
          %p430 = scmp.lt.s32.totalorder %s31, 1
          %s431 = scalar_select %p430, %s31, 1
          %s432 = smul.addr %s431, 16
          %s433 = smul.addr %s432, 4
          %s434 = scalar_lea.vmem %s5, %s433
        $region52: #{tpu_custom_call.1} parent=27 // pred_fallthru
          _
        // Predicated region
        $region53: #{tpu_custom_call.1} parent=27 // pred_check
          %p435 = pneg %p227
        $region54: #{tpu_custom_call.1} parent=27 // pred_check_branch
          %437 = sbr.rel (%p435) target = $region56
        $region55: #{tpu_custom_call.1} parent=27 // pred_region
          %s438 = sadd.s32 %s32, %s33
          %s439 = smul.u32 2, %s438
          %p440 = scmp.lt.s32.totalorder %s31, 1
          %s441 = scalar_select %p440, %s31, 1
          %p442 = scmp.lt.s32.totalorder %s439, 1
          %s443 = scalar_select %p442, %s439, 1
          %s444 = smul.addr %s441, 2
          %s445 = sadd.s32 %s443, %s444
          %s446 = smul.addr %s445, 4
          %s447 = scalar_lea.vmem %s6, %s446
          %s448 = sadd.s32 %s32, %s33
          %s449 = smul.u32 2, %s448
        $region56: #{tpu_custom_call.1} parent=27 // pred_fallthru
          _
      $region28: #{tpu_custom_call.1} parent=5 // pred_fallthru
        _
      %p450 = scmp.le.s32.totalorder 1, %s24
      %p451 = scmp.lt.s32.totalorder %s24, 3
      %p452 = pnand %p450, %p451
      %p453 = pneg %p452
      // Predicated region
      $region57: #{tpu_custom_call.1} parent=5 // pred_check
        _
      $region58: #{tpu_custom_call.1} parent=5 // pred_check_branch
        %455 = sbr.rel (%p452) target = $region60
      $region59: #{tpu_custom_call.1} parent=5 // pred_region
        %s456 = ssub.s32 %s24, 1
        %s457 = sadd.s32 %s35, %s36
        %s458 = smul.u32 2, %s457
        %p459 = scmp.lt.s32.totalorder %s34, 1
        %s460 = scalar_select %p459, %s34, 1
        %p461 = scmp.lt.s32.totalorder %s458, 1
        %s462 = scalar_select %p461, %s458, 1
        %s463 = smul.addr %s460, 2
        %s464 = sadd.s32 %s462, %s463
        %s465 = smul.addr %s464, 8
        %s466 = scalar_lea.vmem %s0, %s465
        %p467 = pneg %p73
        %p468 = pneg %p70
        %p469 = scmp.lt.s32.totalorder %s34, 1
        %s470 = scalar_select %p469, %s34, 1
        %s471 = scalar_lea.vmem %s1, %s470
        %p472 = pneg %p99
        %p473 = pneg %p96
        %p474 = scmp.lt.s32.totalorder %s34, 1
        %s475 = scalar_select %p474, %s34, 1
        %s476 = smul.addr %s475, 16
        %s477 = smul.addr %s476, 8
        %s478 = scalar_lea.vmem %s2, %s477
        %p479 = pneg %p125
        %p480 = pneg %p122
        %p481 = scmp.lt.s32.totalorder %s34, 1
        %s482 = scalar_select %p481, %s34, 1
        %s483 = scalar_lea.vmem %s3, %s482
        %p484 = pneg %p151
        %p485 = pneg %p148
        %p486 = scmp.lt.s32.totalorder %s34, 1
        %s487 = scalar_select %p486, %s34, 1
        %s488 = smul.addr %s487, 16
        %s489 = smul.addr %s488, 4
        %s490 = scalar_lea.vmem %s4, %s489
        %p491 = pneg %p177
        %p492 = pneg %p174
        %p493 = scmp.lt.s32.totalorder %s34, 1
        %s494 = scalar_select %p493, %s34, 1
        %s495 = smul.addr %s494, 16
        %s496 = smul.addr %s495, 4
        %s497 = scalar_lea.vmem %s5, %s496
        %p498 = pneg %p203
        %p499 = pneg %p200
        %s500 = sadd.s32 %s35, %s36
        %s501 = smul.u32 2, %s500
        %p502 = scmp.lt.s32.totalorder %s34, 1
        %s503 = scalar_select %p502, %s34, 1
        %p504 = scmp.lt.s32.totalorder %s501, 1
        %s505 = scalar_select %p504, %s501, 1
        %s506 = smul.addr %s503, 2
        %s507 = sadd.s32 %s505, %s506
        %s508 = smul.addr %s507, 4
        %s509 = scalar_lea.vmem %s6, %s508
        %p510 = pneg %p233
        %p511 = pneg %p230
        %p512 = pneg %p254
        %p513 = pneg %p251
        %p514 = pneg %p275
        %p515 = pneg %p272
        %p516 = pneg %p296
        %p517 = pneg %p293
        %p518 = pneg %p326
        %p519 = pneg %p323
        %s520 = sand.u32 %s313, 1
        %s521 = scalar_lea.sflag [#allocation4], %s520
        %s522 = sand.u32 %s313, 1
        %s523 = smul.addr %s522, 16
        %s524 = scalar_lea.vmem [#allocation3], %s523
        %p525 = pneg %p356
        %p526 = pneg %p353
        %s527 = sand.u32 %s343, 1
        %s528 = scalar_lea.sflag [#allocation6], %s527
        %s529 = sand.u32 %s343, 1
        %s530 = smul.addr %s529, 8
        %s531 = scalar_lea.vmem [#allocation5], %s530
        %s532 = sadd.s32 %s35, %s36
        %s533 = smul.u32 2, %s532
        %p534 = scmp.lt.s32.totalorder %s34, 1
        %s535 = scalar_select %p534, %s34, 1
        %p536 = scmp.lt.s32.totalorder %s533, 1
        %s537 = scalar_select %p536, %s533, 1
        %s538 = smul.addr %s535, 2
        %s539 = sadd.s32 %s537, %s538
        %s540 = smul.addr %s539, 8
        %s541 = scalar_lea.vmem %s0, %s540
        %s542 = sadd.s32 %s35, %s36
        %s543 = smul.u32 2, %s542
        %p544 = scmp.lt.s32.totalorder %s34, 1
        %s545 = scalar_select %p544, %s34, 1
        %s546 = scalar_lea.vmem %s1, %s545
        %p547 = scmp.lt.s32.totalorder %s34, 1
        %s548 = scalar_select %p547, %s34, 1
        %s549 = smul.addr %s548, 16
        %s550 = smul.addr %s549, 8
        %s551 = scalar_lea.vmem %s2, %s550
        %p552 = scmp.lt.s32.totalorder %s34, 1
        %s553 = scalar_select %p552, %s34, 1
        %s554 = scalar_lea.vmem %s3, %s553
        %p555 = scmp.lt.s32.totalorder %s34, 1
        %s556 = scalar_select %p555, %s34, 1
        %s557 = smul.addr %s556, 16
        %s558 = smul.addr %s557, 4
        %s559 = scalar_lea.vmem %s4, %s558
        %p560 = scmp.lt.s32.totalorder %s34, 1
        %s561 = scalar_select %p560, %s34, 1
        %s562 = smul.addr %s561, 16
        %s563 = smul.addr %s562, 4
        %s564 = scalar_lea.vmem %s5, %s563
        %s565 = sadd.s32 %s35, %s36
        %s566 = smul.u32 2, %s565
        %p567 = scmp.lt.s32.totalorder %s34, 1
        %s568 = scalar_select %p567, %s34, 1
        %p569 = scmp.lt.s32.totalorder %s566, 1
        %s570 = scalar_select %p569, %s566, 1
        %s571 = smul.addr %s568, 2
        %s572 = sadd.s32 %s570, %s571
        %s573 = smul.addr %s572, 4
        %s574 = scalar_lea.vmem %s6, %s573
        %s575 = sadd.s32 %s35, %s36
        %s576 = smul.u32 2, %s575
        %s577 = sadd.s32 %s35, %s36
        %s578 = smul.u32 2, %s577
        %s579 = sadd.s32 %s35, %s36
        %s580 = smul.u32 2, %s579
        %p582 = scmp.eq.s32.totalorder %s36, 0
        // Predicated region
        $region61: #{tpu_custom_call.1} parent=59 // pred_check
          %p583 = pneg %p582
        $region62: #{tpu_custom_call.1} parent=59 // pred_check_branch
          %585 = sbr.rel (%p583) target = $region64
        $region63: #{tpu_custom_call.1} parent=59 // pred_region
          %v586 = vld [vmem:[%s559] sm:$0xf]
          %v587 = vld [vmem:[%s559 + $0x4] sm:$0xf]
          %v588 = vld [vmem:[%s559 + $0x8] sm:$0xf]
          %v589 = vld [vmem:[%s559 + $0xc] sm:$0xf]
          %v590 = vld [vmem:[%s559 + $0x10] sm:$0xf]
          %v591 = vld [vmem:[%s559 + $0x14] sm:$0xf]
          %v592 = vld [vmem:[%s559 + $0x18] sm:$0xf]
          %v593 = vld [vmem:[%s559 + $0x1c] sm:$0xf]
          %v594 = vld [vmem:[%s559 + $0x20] sm:$0xf]
          %v595 = vld [vmem:[%s559 + $0x24] sm:$0xf]
          %v596 = vld [vmem:[%s559 + $0x28] sm:$0xf]
          %v597 = vld [vmem:[%s559 + $0x2c] sm:$0xf]
          %v598 = vld [vmem:[%s559 + $0x30] sm:$0xf]
          %v599 = vld [vmem:[%s559 + $0x34] sm:$0xf]
          %v600 = vld [vmem:[%s559 + $0x38] sm:$0xf]
          %v601 = vld [vmem:[%s559 + $0x3c] sm:$0xf]
          %v602 = vld [vmem:[%s564] sm:$0xf]
          %v603 = vld [vmem:[%s564 + $0x4] sm:$0xf]
          %v604 = vld [vmem:[%s564 + $0x8] sm:$0xf]
          %v605 = vld [vmem:[%s564 + $0xc] sm:$0xf]
          %v606 = vld [vmem:[%s564 + $0x10] sm:$0xf]
          %v607 = vld [vmem:[%s564 + $0x14] sm:$0xf]
          %v608 = vld [vmem:[%s564 + $0x18] sm:$0xf]
          %v609 = vld [vmem:[%s564 + $0x1c] sm:$0xf]
          %v610 = vld [vmem:[%s564 + $0x20] sm:$0xf]
          %v611 = vld [vmem:[%s564 + $0x24] sm:$0xf]
          %v612 = vld [vmem:[%s564 + $0x28] sm:$0xf]
          %v613 = vld [vmem:[%s564 + $0x2c] sm:$0xf]
          %v614 = vld [vmem:[%s564 + $0x30] sm:$0xf]
          %v615 = vld [vmem:[%s564 + $0x34] sm:$0xf]
          %v616 = vld [vmem:[%s564 + $0x38] sm:$0xf]
          %v617 = vld [vmem:[%s564 + $0x3c] sm:$0xf]
          %v618 = vld [vmem:[%s8] sm:$0xf]
          %v619 = vld [vmem:[%s8 + $0x4] sm:$0xf]
          %v620 = vld [vmem:[%s8 + $0x8] sm:$0xf]
          %v621 = vld [vmem:[%s8 + $0xc] sm:$0xf]
          %v622 = vld [vmem:[%s8 + $0x10] sm:$0xf]
          %v623 = vld [vmem:[%s8 + $0x14] sm:$0xf]
          %v624 = vld [vmem:[%s8 + $0x18] sm:$0xf]
          %v625 = vld [vmem:[%s8 + $0x1c] sm:$0xf]
          %v626 = vld [vmem:[%s9] sm:$0xf]
          %v627 = vld [vmem:[%s9 + $0x4] sm:$0xf]
          %v628 = vld [vmem:[%s9 + $0x8] sm:$0xf]
          %v629 = vld [vmem:[%s9 + $0xc] sm:$0xf]
          %v630 = vld [vmem:[%s9 + $0x10] sm:$0xf]
          %v631 = vld [vmem:[%s9 + $0x14] sm:$0xf]
          %v632 = vld [vmem:[%s9 + $0x18] sm:$0xf]
          %v633 = vld [vmem:[%s9 + $0x1c] sm:$0xf]
          %v650 = vunpack.c.l.b16 %v602
          %v651 = vunpack.c.l.b16 %v603
          %v652 = vunpack.c.l.b16 %v604
          %v653 = vunpack.c.l.b16 %v605
          %v654 = vunpack.c.l.b16 %v606
          %v655 = vunpack.c.l.b16 %v607
          %v656 = vunpack.c.l.b16 %v608
          %v657 = vunpack.c.l.b16 %v609
          %v658 = vunpack.c.l.b16 %v610
          %v659 = vunpack.c.l.b16 %v611
          %v660 = vunpack.c.l.b16 %v612
          %v661 = vunpack.c.l.b16 %v613
          %v662 = vunpack.c.l.b16 %v614
          %v663 = vunpack.c.l.b16 %v615
          %v664 = vunpack.c.l.b16 %v616
          %v665 = vunpack.c.l.b16 %v617
          %v666 = vpack.c.b16 %v651, %v650
          %v667 = vpack.c.b16 %v653, %v652
          %v668 = vpack.c.b16 %v655, %v654
          %v669 = vpack.c.b16 %v657, %v656
          %v670 = vpack.c.b16 %v659, %v658
          %v671 = vpack.c.b16 %v661, %v660
          %v672 = vpack.c.b16 %v663, %v662
          %v673 = vpack.c.b16 %v665, %v664
          %v682 = vunpack.c.l.b16 %v626
          %v683 = vunpack.c.l.b16 %v627
          %v684 = vunpack.c.l.b16 %v628
          %v685 = vunpack.c.l.b16 %v629
          %v686 = vunpack.c.l.b16 %v630
          %v687 = vunpack.c.l.b16 %v631
          %v688 = vunpack.c.l.b16 %v632
          %v689 = vunpack.c.l.b16 %v633
          %v690 = vpack.c.b16 %v683, %v682
          %v691 = vpack.c.b16 %v685, %v684
          %v692 = vpack.c.b16 %v687, %v686
          %v693 = vpack.c.b16 %v689, %v688
          %vm698 = vcmask 523264
          %v700 = vsel %vm698, %v666, 0
          %v703 = vsel %vm698, %v667, 0
          %v706 = vsel %vm698, %v668, 0
          %v709 = vsel %vm698, %v669, 0
          %v712 = vsel %vm698, %v670, 0
          %v715 = vsel %vm698, %v671, 0
          %v718 = vsel %vm698, %v672, 0
          %v721 = vsel %vm698, %v673, 0
          %723 = vmatpush.bf16.msra.mxu0 0
          %724 = vmatpush.bf16.msra.mxu0 0
          %725 = vmatpush.bf16.msra.mxu0 0
          %726 = vmatpush.bf16.msra.mxu0 0
          %727 = vmatpush.bf16.msra.mxu0 %v693
          %728 = vmatpush.bf16.msra.mxu0 %v692
          %729 = vmatpush.bf16.msra.mxu0 %v691
          %730 = vmatpush.bf16.msra.mxu0 %v690
          %731 = vmatmul.bf16.gmra.mxu0 %v700
          %v732 = vpop.f32.mrf.mxu0
          %v733 = vadd.f32 0.0, %v732
          %v734 = vpop.f32.mrf.mxu0
          %v735 = vadd.f32 0.0, %v734
          %736 = vmatmul.bf16.gmra.mxu0 %v703
          %v737 = vpop.f32.mrf.mxu0
          %v738 = vadd.f32 0.0, %v737
          %v739 = vpop.f32.mrf.mxu0
          %v740 = vadd.f32 0.0, %v739
          %741 = vmatmul.bf16.gmra.mxu0 %v706
          %v742 = vpop.f32.mrf.mxu0
          %v743 = vadd.f32 0.0, %v742
          %v744 = vpop.f32.mrf.mxu0
          %v745 = vadd.f32 0.0, %v744
          %746 = vmatmul.bf16.gmra.mxu0 %v709
          %v747 = vpop.f32.mrf.mxu0
          %v748 = vadd.f32 0.0, %v747
          %v749 = vpop.f32.mrf.mxu0
          %v750 = vadd.f32 0.0, %v749
          %751 = vmatmul.bf16.gmra.mxu0 %v712
          %v752 = vpop.f32.mrf.mxu0
          %v753 = vadd.f32 0.0, %v752
          %v754 = vpop.f32.mrf.mxu0
          %v755 = vadd.f32 0.0, %v754
          %756 = vmatmul.bf16.gmra.mxu0 %v715
          %v757 = vpop.f32.mrf.mxu0
          %v758 = vadd.f32 0.0, %v757
          %v759 = vpop.f32.mrf.mxu0
          %v760 = vadd.f32 0.0, %v759
          %761 = vmatmul.bf16.gmra.mxu0 %v718
          %v762 = vpop.f32.mrf.mxu0
          %v763 = vadd.f32 0.0, %v762
          %v764 = vpop.f32.mrf.mxu0
          %v765 = vadd.f32 0.0, %v764
          %766 = vmatmul.bf16.gmra.mxu0 %v721
          %v767 = vpop.f32.mrf.mxu0
          %v768 = vadd.f32 0.0, %v767
          %v769 = vpop.f32.mrf.mxu0
          %v770 = vadd.f32 0.0, %v769
          %771 = vdwg.mxu0
          %v788 = vunpack.c.l.b16 %v586
          %v789 = vunpack.c.l.b16 %v587
          %v790 = vunpack.c.l.b16 %v588
          %v791 = vunpack.c.l.b16 %v589
          %v792 = vunpack.c.l.b16 %v590
          %v793 = vunpack.c.l.b16 %v591
          %v794 = vunpack.c.l.b16 %v592
          %v795 = vunpack.c.l.b16 %v593
          %v796 = vunpack.c.l.b16 %v594
          %v797 = vunpack.c.l.b16 %v595
          %v798 = vunpack.c.l.b16 %v596
          %v799 = vunpack.c.l.b16 %v597
          %v800 = vunpack.c.l.b16 %v598
          %v801 = vunpack.c.l.b16 %v599
          %v802 = vunpack.c.l.b16 %v600
          %v803 = vunpack.c.l.b16 %v601
          %v804 = vpack.c.b16 %v789, %v788
          %v805 = vpack.c.b16 %v791, %v790
          %v806 = vpack.c.b16 %v793, %v792
          %v807 = vpack.c.b16 %v795, %v794
          %v808 = vpack.c.b16 %v797, %v796
          %v809 = vpack.c.b16 %v799, %v798
          %v810 = vpack.c.b16 %v801, %v800
          %v811 = vpack.c.b16 %v803, %v802
          %v820 = vunpack.c.l.b16 %v618
          %v821 = vunpack.c.l.b16 %v619
          %v822 = vunpack.c.l.b16 %v620
          %v823 = vunpack.c.l.b16 %v621
          %v824 = vunpack.c.l.b16 %v622
          %v825 = vunpack.c.l.b16 %v623
          %v826 = vunpack.c.l.b16 %v624
          %v827 = vunpack.c.l.b16 %v625
          %v828 = vpack.c.b16 %v821, %v820
          %v829 = vpack.c.b16 %v823, %v822
          %v830 = vpack.c.b16 %v825, %v824
          %v831 = vpack.c.b16 %v827, %v826
          %v837 = vsel %vm698, %v804, 0
          %v840 = vsel %vm698, %v805, 0
          %v843 = vsel %vm698, %v806, 0
          %v846 = vsel %vm698, %v807, 0
          %v849 = vsel %vm698, %v808, 0
          %v852 = vsel %vm698, %v809, 0
          %v855 = vsel %vm698, %v810, 0
          %v858 = vsel %vm698, %v811, 0
          %860 = vmatpush.bf16.msra.mxu0 0
          %861 = vmatpush.bf16.msra.mxu0 0
          %862 = vmatpush.bf16.msra.mxu0 0
          %863 = vmatpush.bf16.msra.mxu0 0
          %864 = vmatpush.bf16.msra.mxu0 %v831
          %865 = vmatpush.bf16.msra.mxu0 %v830
          %866 = vmatpush.bf16.msra.mxu0 %v829
          %867 = vmatpush.bf16.msra.mxu0 %v828
          %868 = vmatmul.bf16.gmra.mxu0 %v837
          %v869 = vpop.f32.mrf.mxu0
          %v870 = vadd.f32 %v733, %v869
          %v871 = vpop.f32.mrf.mxu0
          %v872 = vadd.f32 %v735, %v871
          %873 = vmatmul.bf16.gmra.mxu0 %v840
          %v874 = vpop.f32.mrf.mxu0
          %v875 = vadd.f32 %v738, %v874
          %v876 = vpop.f32.mrf.mxu0
          %v877 = vadd.f32 %v740, %v876
          %878 = vmatmul.bf16.gmra.mxu0 %v843
          %v879 = vpop.f32.mrf.mxu0
          %v880 = vadd.f32 %v743, %v879
          %v881 = vpop.f32.mrf.mxu0
          %v882 = vadd.f32 %v745, %v881
          %883 = vmatmul.bf16.gmra.mxu0 %v846
          %v884 = vpop.f32.mrf.mxu0
          %v885 = vadd.f32 %v748, %v884
          %v886 = vpop.f32.mrf.mxu0
          %v887 = vadd.f32 %v750, %v886
          %888 = vmatmul.bf16.gmra.mxu0 %v849
          %v889 = vpop.f32.mrf.mxu0
          %v890 = vadd.f32 %v753, %v889
          %v891 = vpop.f32.mrf.mxu0
          %v892 = vadd.f32 %v755, %v891
          %893 = vmatmul.bf16.gmra.mxu0 %v852
          %v894 = vpop.f32.mrf.mxu0
          %v895 = vadd.f32 %v758, %v894
          %v896 = vpop.f32.mrf.mxu0
          %v897 = vadd.f32 %v760, %v896
          %898 = vmatmul.bf16.gmra.mxu0 %v855
          %v899 = vpop.f32.mrf.mxu0
          %v900 = vadd.f32 %v763, %v899
          %v901 = vpop.f32.mrf.mxu0
          %v902 = vadd.f32 %v765, %v901
          %903 = vmatmul.bf16.gmra.mxu0 %v858
          %v904 = vpop.f32.mrf.mxu0
          %v905 = vadd.f32 %v768, %v904
          %v906 = vpop.f32.mrf.mxu0
          %v907 = vadd.f32 %v770, %v906
          %908 = vdwg.mxu0
          %v909 = vld [vmem:[%s551] sm:$0xff]
          %v910 = vld [vmem:[%s551 + $0x8] sm:$0xff]
          %v911 = vld [vmem:[%s551 + $0x10] sm:$0xff]
          %v912 = vld [vmem:[%s551 + $0x18] sm:$0xff]
          %v913 = vld [vmem:[%s551 + $0x20] sm:$0xff]
          %v914 = vld [vmem:[%s551 + $0x28] sm:$0xff]
          %v915 = vld [vmem:[%s551 + $0x30] sm:$0xff]
          %v916 = vld [vmem:[%s551 + $0x38] sm:$0xff]
          %v917 = vld [vmem:[%s551 + $0x40] sm:$0xff]
          %v918 = vld [vmem:[%s551 + $0x48] sm:$0xff]
          %v919 = vld [vmem:[%s551 + $0x50] sm:$0xff]
          %v920 = vld [vmem:[%s551 + $0x58] sm:$0xff]
          %v921 = vld [vmem:[%s551 + $0x60] sm:$0xff]
          %v922 = vld [vmem:[%s551 + $0x68] sm:$0xff]
          %v923 = vld [vmem:[%s551 + $0x70] sm:$0xff]
          %v924 = vld [vmem:[%s551 + $0x78] sm:$0xff]
          %v925 = vld [vmem:[%s554] sm:$0x1]
          %927 = vset.pattern.permute.xlu0 0
          %928 = vperm.xlu0 %927, %v909
          %v929 = vpop.permute.xlu0 %928
          %932 = vset.pattern.permute.xlu0 0
          %933 = vperm.xlu0 %932, %v910
          %v934 = vpop.permute.xlu0 %933
          %937 = vset.pattern.permute.xlu0 0
          %938 = vperm.xlu0 %937, %v911
          %v939 = vpop.permute.xlu0 %938
          %942 = vset.pattern.permute.xlu0 0
          %943 = vperm.xlu0 %942, %v912
          %v944 = vpop.permute.xlu0 %943
          %947 = vset.pattern.permute.xlu0 0
          %948 = vperm.xlu0 %947, %v913
          %v949 = vpop.permute.xlu0 %948
          %952 = vset.pattern.permute.xlu0 0
          %953 = vperm.xlu0 %952, %v914
          %v954 = vpop.permute.xlu0 %953
          %957 = vset.pattern.permute.xlu0 0
          %958 = vperm.xlu0 %957, %v915
          %v959 = vpop.permute.xlu0 %958
          %962 = vset.pattern.permute.xlu0 0
          %963 = vperm.xlu0 %962, %v916
          %v964 = vpop.permute.xlu0 %963
          %967 = vset.pattern.permute.xlu0 0
          %968 = vperm.xlu0 %967, %v917
          %v969 = vpop.permute.xlu0 %968
          %972 = vset.pattern.permute.xlu0 0
          %973 = vperm.xlu0 %972, %v918
          %v974 = vpop.permute.xlu0 %973
          %977 = vset.pattern.permute.xlu0 0
          %978 = vperm.xlu0 %977, %v919
          %v979 = vpop.permute.xlu0 %978
          %982 = vset.pattern.permute.xlu0 0
          %983 = vperm.xlu0 %982, %v920
          %v984 = vpop.permute.xlu0 %983
          %987 = vset.pattern.permute.xlu0 0
          %988 = vperm.xlu0 %987, %v921
          %v989 = vpop.permute.xlu0 %988
          %992 = vset.pattern.permute.xlu0 0
          %993 = vperm.xlu0 %992, %v922
          %v994 = vpop.permute.xlu0 %993
          %997 = vset.pattern.permute.xlu0 0
          %998 = vperm.xlu0 %997, %v923
          %v999 = vpop.permute.xlu0 %998
          %1002 = vset.pattern.permute.xlu0 0
          %1003 = vperm.xlu0 %1002, %v924
          %v1004 = vpop.permute.xlu0 %1003
          %v1007 = vperm.slane %v925, 0
          %v1009 = vmul.f32 %v929, %v1007
          %v1010 = vmul.f32 %v934, %v1007
          %v1011 = vmul.f32 %v939, %v1007
          %v1012 = vmul.f32 %v944, %v1007
          %v1013 = vmul.f32 %v949, %v1007
          %v1014 = vmul.f32 %v954, %v1007
          %v1015 = vmul.f32 %v959, %v1007
          %v1016 = vmul.f32 %v964, %v1007
          %v1017 = vmul.f32 %v969, %v1007
          %v1018 = vmul.f32 %v974, %v1007
          %v1019 = vmul.f32 %v979, %v1007
          %v1020 = vmul.f32 %v984, %v1007
          %v1021 = vmul.f32 %v989, %v1007
          %v1022 = vmul.f32 %v994, %v1007
          %v1023 = vmul.f32 %v999, %v1007
          %v1024 = vmul.f32 %v1004, %v1007
          %v1025 = vadd.f32 %v870, %v1009
          %v1026 = vadd.f32 %v872, %v1010
          %v1027 = vadd.f32 %v875, %v1011
          %v1028 = vadd.f32 %v877, %v1012
          %v1029 = vadd.f32 %v880, %v1013
          %v1030 = vadd.f32 %v882, %v1014
          %v1031 = vadd.f32 %v885, %v1015
          %v1032 = vadd.f32 %v887, %v1016
          %v1033 = vadd.f32 %v890, %v1017
          %v1034 = vadd.f32 %v892, %v1018
          %v1035 = vadd.f32 %v895, %v1019
          %v1036 = vadd.f32 %v897, %v1020
          %v1037 = vadd.f32 %v900, %v1021
          %v1038 = vadd.f32 %v902, %v1022
          %v1039 = vadd.f32 %v905, %v1023
          %v1040 = vadd.f32 %v907, %v1024
          %v1041 = vld [vmem:[%s7] sm:$0xf]
          %v1042 = vld [vmem:[%s7 + $0x4] sm:$0xf]
          %v1043 = vld [vmem:[%s7 + $0x8] sm:$0xf]
          %v1044 = vld [vmem:[%s7 + $0xc] sm:$0xf]
          %v1045 = vld [vmem:[%s7 + $0x10] sm:$0xf]
          %v1046 = vld [vmem:[%s7 + $0x14] sm:$0xf]
          %v1047 = vld [vmem:[%s7 + $0x18] sm:$0xf]
          %v1048 = vld [vmem:[%s7 + $0x1c] sm:$0xf]
          %v1049 = vpack.c.bf16 %v1026, %v1025
          %v1050 = vpack.c.bf16 %v1028, %v1027
          %v1051 = vpack.c.bf16 %v1030, %v1029
          %v1052 = vpack.c.bf16 %v1032, %v1031
          %v1053 = vpack.c.bf16 %v1034, %v1033
          %v1054 = vpack.c.bf16 %v1036, %v1035
          %v1055 = vpack.c.bf16 %v1038, %v1037
          %v1056 = vpack.c.bf16 %v1040, %v1039
          %v1065 = vunpack.c.l.b16 %v1041
          %v1066 = vunpack.c.l.b16 %v1042
          %v1067 = vunpack.c.l.b16 %v1043
          %v1068 = vunpack.c.l.b16 %v1044
          %v1069 = vunpack.c.l.b16 %v1045
          %v1070 = vunpack.c.l.b16 %v1046
          %v1071 = vunpack.c.l.b16 %v1047
          %v1072 = vunpack.c.l.b16 %v1048
          %v1073 = vpack.c.b16 %v1066, %v1065
          %v1074 = vpack.c.b16 %v1068, %v1067
          %v1075 = vpack.c.b16 %v1070, %v1069
          %v1076 = vpack.c.b16 %v1072, %v1071
          %v1078 = vsel %vm698, %v1073, 0
          %v1081 = vsel %vm698, %v1074, 0
          %v1084 = vsel %vm698, %v1075, 0
          %v1087 = vsel %vm698, %v1076, 0
          %v1090 = vsel %vm698, %v1049, 0
          %v1093 = vsel %vm698, %v1050, 0
          %v1096 = vsel %vm698, %v1051, 0
          %v1099 = vsel %vm698, %v1052, 0
          %v1102 = vsel %vm698, %v1053, 0
          %v1105 = vsel %vm698, %v1054, 0
          %v1108 = vsel %vm698, %v1055, 0
          %v1111 = vsel %vm698, %v1056, 0
          %1113 = vmatpush.bf16.xpose.msra.mxu0 %v1111
          %1114 = vmatpush.bf16.xpose.msra.mxu0 %v1108
          %1115 = vmatpush.bf16.xpose.msra.mxu0 %v1105
          %1116 = vmatpush.bf16.xpose.msra.mxu0 %v1102
          %1117 = vmatpush.bf16.xpose.msra.mxu0 %v1099
          %1118 = vmatpush.bf16.xpose.msra.mxu0 %v1096
          %1119 = vmatpush.bf16.xpose.msra.mxu0 %v1093
          %1120 = vmatpush.bf16.xpose.msra.mxu0 %v1090
          %1121 = vmatmul.bf16.gmra.mxu0 %v1078
          %v1122 = vpop.f32.mrf.mxu0
          %v1123 = vadd.f32 0.0, %v1122
          %v1124 = vpop.f32.mrf.mxu0
          %v1125 = vadd.f32 0.0, %v1124
          %1126 = vmatmul.bf16.gmra.mxu0 %v1081
          %v1127 = vpop.f32.mrf.mxu0
          %v1128 = vadd.f32 0.0, %v1127
          %v1129 = vpop.f32.mrf.mxu0
          %v1130 = vadd.f32 0.0, %v1129
          %1131 = vmatmul.bf16.gmra.mxu0 %v1084
          %v1132 = vpop.f32.mrf.mxu0
          %v1133 = vadd.f32 0.0, %v1132
          %v1134 = vpop.f32.mrf.mxu0
          %v1135 = vadd.f32 0.0, %v1134
          %1136 = vmatmul.bf16.gmra.mxu0 %v1087
          %v1137 = vpop.f32.mrf.mxu0
          %v1138 = vadd.f32 0.0, %v1137
          %v1139 = vpop.f32.mrf.mxu0
          %v1140 = vadd.f32 0.0, %v1139
          %1141 = vdwg.mxu0
          %v1142 = vpack.c.bf16 %v1123, %v1123
          %v1143 = vpack.c.bf16 %v1125, %v1125
          %v1144 = vpack.c.bf16 %v1128, %v1128
          %v1145 = vpack.c.bf16 %v1130, %v1130
          %v1146 = vpack.c.bf16 %v1133, %v1133
          %v1147 = vpack.c.bf16 %v1135, %v1135
          %v1148 = vpack.c.bf16 %v1138, %v1138
          %v1149 = vpack.c.bf16 %v1140, %v1140
          %1150 = vst [vmem:[#allocation2] sm:$0xf] %v1142
          %1151 = vst [vmem:[#allocation2 + $0x4] sm:$0xf] %v1143
          %1152 = vst [vmem:[#allocation2 + $0x8] sm:$0xf] %v1144
          %1153 = vst [vmem:[#allocation2 + $0xc] sm:$0xf] %v1145
          %1154 = vst [vmem:[#allocation2 + $0x10] sm:$0xf] %v1146
          %1155 = vst [vmem:[#allocation2 + $0x14] sm:$0xf] %v1147
          %1156 = vst [vmem:[#allocation2 + $0x18] sm:$0xf] %v1148
          %1157 = vst [vmem:[#allocation2 + $0x1c] sm:$0xf] %v1149
        $region64: #{tpu_custom_call.1} parent=59 // pred_fallthru
          _
        %v1158 = vld [vmem:[%s574] sm:$0xf]
        %v1159 = vld [vmem:[%s574 + $0x4] sm:$0xf]
        %v1160 = vld [vmem:[#allocation2] sm:$0xf]
        %v1161 = vld [vmem:[#allocation2 + $0x4] sm:$0xf]
        %v1162 = vld [vmem:[#allocation2 + $0x8] sm:$0xf]
        %v1163 = vld [vmem:[#allocation2 + $0xc] sm:$0xf]
        %v1164 = vld [vmem:[#allocation2 + $0x10] sm:$0xf]
        %v1165 = vld [vmem:[#allocation2 + $0x14] sm:$0xf]
        %v1166 = vld [vmem:[#allocation2 + $0x18] sm:$0xf]
        %v1167 = vld [vmem:[#allocation2 + $0x1c] sm:$0xf]
        %v1170 = vunpack.c.l.b16 %v1158
        %v1171 = vunpack.c.l.b16 %v1159
        %v1172 = vpack.c.b16 %v1171, %v1170
        %v1181 = vunpack.c.l.b16 %v1160
        %v1182 = vunpack.c.l.b16 %v1161
        %v1183 = vunpack.c.l.b16 %v1162
        %v1184 = vunpack.c.l.b16 %v1163
        %v1185 = vunpack.c.l.b16 %v1164
        %v1186 = vunpack.c.l.b16 %v1165
        %v1187 = vunpack.c.l.b16 %v1166
        %v1188 = vunpack.c.l.b16 %v1167
        %v1189 = vpack.c.b16 %v1182, %v1181
        %v1190 = vpack.c.b16 %v1184, %v1183
        %v1191 = vpack.c.b16 %v1186, %v1185
        %v1192 = vpack.c.b16 %v1188, %v1187
        %vm1197 = vcmask 523264
        %v1199 = vsel %vm1197, %v1172, 0
        %1201 = vmatpush.bf16.msra.mxu0 0
        %1202 = vmatpush.bf16.msra.mxu0 0
        %1203 = vmatpush.bf16.msra.mxu0 0
        %1204 = vmatpush.bf16.msra.mxu0 0
        %1205 = vmatpush.bf16.msra.mxu0 %v1192
        %1206 = vmatpush.bf16.msra.mxu0 %v1191
        %1207 = vmatpush.bf16.msra.mxu0 %v1190
        %1208 = vmatpush.bf16.msra.mxu0 %v1189
        %1209 = vmatmul.bf16.gmra.mxu0 %v1199
        %v1210 = vpop.f32.mrf.mxu0
        %v1211 = vadd.f32 0.0, %v1210
        %v1212 = vpop.f32.mrf.mxu0
        %v1213 = vadd.f32 0.0, %v1212
        %1214 = vdwg.mxu0
        %v1215 = vld [vmem:[%s541] sm:$0xff]
        %v1216 = vld [vmem:[%s541 + $0x8] sm:$0xff]
        %v1217 = vld [vmem:[%s546] sm:$0x1]
        %1218 = vset.pattern.permute.xlu0 0
        %1219 = vperm.xlu0 %1218, %v1215
        %v1220 = vpop.permute.xlu0 %1219
        %1221 = vset.pattern.permute.xlu0 0
        %1222 = vperm.xlu0 %1221, %v1216
        %v1223 = vpop.permute.xlu0 %1222
        %v1224 = vperm.slane %v1217, 0
        %vm1225 = vcmp.eq.s32.totalorder %v1220, %v1224
        %vm1226 = vcmp.eq.s32.totalorder %v1223, %v1224
        %v1227 = vsub.f32 %v1211, 1e+09
        %v1228 = vsub.f32 %v1213, 1e+09
        %v1229 = vsel %vm1225, %v1211, %v1227
        %v1230 = vsel %vm1226, %v1213, %v1228
        %1231 = vmax.xlane.f32.xlu0 %v1229
        %v1232 = vpop.xlane.xlu0 %1231
        %1233 = vmax.xlane.f32.xlu0 %v1230
        %v1234 = vpop.xlane.xlu0 %1233
        %v1235 = vsub.f32 %v1229, %v1232
        %v1236 = vsub.f32 %v1230, %v1234
        %v1237 = vmul.f32 %v1235, 1.442695
        %v1238 = vpow.pop %v1237
        %v1239 = vmul.f32 %v1236, 1.442695
        %v1240 = vpow.pop %v1239
        %1241 = vadd.xlane.f32.xlu0 %v1238
        %v1242 = vpop.xlane.xlu0 %1241
        %1243 = vadd.xlane.f32.xlu0 %v1240
        %v1244 = vpop.xlane.xlu0 %1243
        %v1245 = vrcp.pop %v1242
        %v1246 = vrcp.pop %v1244
        %v1247 = vmul.f32 %v1238, %v1245
        %v1248 = vmul.f32 %v1240, %v1246
        %v1249 = vpack.c.bf16 %v1247, %v1247
        %v1250 = vpack.c.bf16 %v1248, %v1248
        %v1251 = vld [vmem:[%s559] sm:$0xf]
        %v1252 = vld [vmem:[%s559 + $0x4] sm:$0xf]
        %v1253 = vld [vmem:[%s559 + $0x8] sm:$0xf]
        %v1254 = vld [vmem:[%s559 + $0xc] sm:$0xf]
        %v1255 = vld [vmem:[%s559 + $0x10] sm:$0xf]
        %v1256 = vld [vmem:[%s559 + $0x14] sm:$0xf]
        %v1257 = vld [vmem:[%s559 + $0x18] sm:$0xf]
        %v1258 = vld [vmem:[%s559 + $0x1c] sm:$0xf]
        %v1259 = vld [vmem:[%s559 + $0x20] sm:$0xf]
        %v1260 = vld [vmem:[%s559 + $0x24] sm:$0xf]
        %v1261 = vld [vmem:[%s559 + $0x28] sm:$0xf]
        %v1262 = vld [vmem:[%s559 + $0x2c] sm:$0xf]
        %v1263 = vld [vmem:[%s559 + $0x30] sm:$0xf]
        %v1264 = vld [vmem:[%s559 + $0x34] sm:$0xf]
        %v1265 = vld [vmem:[%s559 + $0x38] sm:$0xf]
        %v1266 = vld [vmem:[%s559 + $0x3c] sm:$0xf]
        %v1269 = vunpack.c.l.b16 %v1249
        %v1270 = vunpack.c.l.b16 %v1250
        %v1271 = vpack.c.b16 %v1270, %v1269
        %v1289 = vunpack.c.l.b16 %v1251
        %v1290 = vunpack.c.l.b16 %v1252
        %v1291 = vunpack.c.l.b16 %v1253
        %v1292 = vunpack.c.l.b16 %v1254
        %v1293 = vunpack.c.l.b16 %v1255
        %v1294 = vunpack.c.l.b16 %v1256
        %v1295 = vunpack.c.l.b16 %v1257
        %v1296 = vunpack.c.l.b16 %v1258
        %v1297 = vunpack.c.l.b16 %v1259
        %v1298 = vunpack.c.l.b16 %v1260
        %v1299 = vunpack.c.l.b16 %v1261
        %v1300 = vunpack.c.l.b16 %v1262
        %v1301 = vunpack.c.l.b16 %v1263
        %v1302 = vunpack.c.l.b16 %v1264
        %v1303 = vunpack.c.l.b16 %v1265
        %v1304 = vunpack.c.l.b16 %v1266
        %v1305 = vpack.c.b16 %v1290, %v1289
        %v1306 = vpack.c.b16 %v1292, %v1291
        %v1307 = vpack.c.b16 %v1294, %v1293
        %v1308 = vpack.c.b16 %v1296, %v1295
        %v1309 = vpack.c.b16 %v1298, %v1297
        %v1310 = vpack.c.b16 %v1300, %v1299
        %v1311 = vpack.c.b16 %v1302, %v1301
        %v1312 = vpack.c.b16 %v1304, %v1303
        %1321 = vmatpush.bf16.msra.mxu0 %v1312
        %1322 = vmatpush.bf16.msra.mxu0 %v1311
        %1323 = vmatpush.bf16.msra.mxu0 %v1310
        %1324 = vmatpush.bf16.msra.mxu0 %v1309
        %1325 = vmatpush.bf16.msra.mxu0 %v1308
        %1326 = vmatpush.bf16.msra.mxu0 %v1307
        %1327 = vmatpush.bf16.msra.mxu0 %v1306
        %1328 = vmatpush.bf16.msra.mxu0 %v1305
        %1329 = vmatmul.bf16.gmra.mxu0 %v1271
        %v1330 = vpop.f32.mrf.mxu0
        %v1331 = vadd.f32 0.0, %v1330
        %v1332 = vpop.f32.mrf.mxu0
        %v1333 = vadd.f32 0.0, %v1332
        %1334 = vdwg.mxu0
        %1335 = vst.msk [vmem:[%s524] sm:$0xff] %vm1197, %v1331
        %1336 = vst.msk [vmem:[%s524 + $0x8] sm:$0xff] %vm1197, %v1333
        %1337 = vst [vmem:[%s531] sm:$0xf] %v1249
        %1338 = vst [vmem:[%s531 + $0x4] sm:$0xf] %v1250
        %s1339 = sand.u32 %s313, 1
        %s1340 = scalar_lea.sflag [#allocation4], %s1339
        %s1341 = sand.u32 %s313, 1
        %s1342 = smul.addr %s1341, 16
        %s1343 = scalar_lea.vmem [#allocation3], %s1342
        %s1344 = sand.u32 %s343, 1
        %s1345 = scalar_lea.sflag [#allocation6], %s1344
        %s1346 = sand.u32 %s343, 1
        %s1347 = smul.addr %s1346, 8
        %s1348 = scalar_lea.vmem [#allocation5], %s1347
        // Predicated region
        $region65: #{tpu_custom_call.1} parent=59 // pred_check
          %p1349 = pneg %p323
        $region66: #{tpu_custom_call.1} parent=59 // pred_check_branch
          %1351 = sbr.rel (%p1349) target = $region68
        $region67: #{tpu_custom_call.1} parent=59 // pred_region
          %s1352 = sadd.s32 %s35, %s36
          %s1353 = smul.u32 2, %s1352
          %1355 = vsyncadd %s1340, 0
          %s1356 = smul.addr %s34, 2
          %s1357 = sadd.s32 %s1353, %s1356
          %s1358 = smul.addr %s1357, 8
          %s1359 = scalar_lea.hbm %s10, %s1358
          %s1360 = sshll.u32 %s1343, 4
          %s1361 = int_to_ptr.vmem [resolvable:$true] %s1360
          %s1362 = sshll.u32 %s1359, 4
          %s1363 = int_to_ptr.hbm [resolvable:$true] %s1362
          %1368 = dma.vmem_to_hbm [thread:$0]  %s1361, 256, %s1363, %s1340, 128, 128, 8
        $region68: #{tpu_custom_call.1} parent=59 // pred_fallthru
          _
        // Predicated region
        $region69: #{tpu_custom_call.1} parent=59 // pred_check
          %p1369 = pneg %p353
        $region70: #{tpu_custom_call.1} parent=59 // pred_check_branch
          %1371 = sbr.rel (%p1369) target = $region72
        $region71: #{tpu_custom_call.1} parent=59 // pred_region
          %s1372 = sadd.s32 %s35, %s36
          %s1373 = smul.u32 2, %s1372
          %1375 = vsyncadd %s1345, 0
          %s1376 = smul.addr %s34, 2
          %s1377 = sadd.s32 %s1373, %s1376
          %s1378 = smul.addr %s1377, 4
          %s1379 = scalar_lea.hbm %s11, %s1378
          %s1380 = sshll.u32 %s1348, 4
          %s1381 = int_to_ptr.vmem [resolvable:$true] %s1380
          %s1382 = sshll.u32 %s1379, 4
          %s1383 = int_to_ptr.hbm [resolvable:$true] %s1382
          %1388 = dma.vmem_to_hbm [thread:$0]  %s1381, 128, %s1383, %s1345, 64, 64, 4
        $region72: #{tpu_custom_call.1} parent=59 // pred_fallthru
          _
      $region60: #{tpu_custom_call.1} parent=5 // pred_fallthru
        _
      %p1389 = scmp.le.s32.totalorder 2, %s24
      // Predicated region
      $region73: #{tpu_custom_call.1} parent=5 // pred_check
        %p1390 = pneg %p1389
      $region74: #{tpu_custom_call.1} parent=5 // pred_check_branch
        %1392 = sbr.rel (%p1390) target = $region76
      $region75: #{tpu_custom_call.1} parent=5 // pred_region
        %s1393 = ssub.s32 %s24, 2
        // Predicated region
        $region77: #{tpu_custom_call.1} parent=75 // pred_check
          %p1394 = pneg %p329
        $region78: #{tpu_custom_call.1} parent=75 // pred_check_branch
          %1396 = sbr.rel (%p1394) target = $region80
        $region79: #{tpu_custom_call.1} parent=75 // pred_region
          %s1397 = sand.u32 %s314, 1
          %s1398 = scalar_lea.sflag [#allocation4], %s1397
          %s1399 = sand.u32 %s314, 1
          %s1400 = smul.addr %s1399, 16
          %s1401 = scalar_lea.vmem [#allocation3], %s1400
          %1403 = dma.done %s1398, 256
        $region80: #{tpu_custom_call.1} parent=75 // pred_fallthru
          _
        // Predicated region
        $region81: #{tpu_custom_call.1} parent=75 // pred_check
          %p1404 = pneg %p359
        $region82: #{tpu_custom_call.1} parent=75 // pred_check_branch
          %1406 = sbr.rel (%p1404) target = $region84
        $region83: #{tpu_custom_call.1} parent=75 // pred_region
          %s1407 = sand.u32 %s344, 1
          %s1408 = scalar_lea.sflag [#allocation6], %s1407
          %s1409 = sand.u32 %s344, 1
          %s1410 = smul.addr %s1409, 8
          %s1411 = scalar_lea.vmem [#allocation5], %s1410
          %1413 = dma.done %s1408, 128
        $region84: #{tpu_custom_call.1} parent=75 // pred_fallthru
          _
      $region76: #{tpu_custom_call.1} parent=5 // pred_fallthru
        _
    $region6: #{tpu_custom_call.1} parent=1 // loop_footer
      %s28 = sadd.s32 1, %s24
    $region7: #{tpu_custom_call.1} parent=1 // loop_footer_branch
      %23 = sbr.rel target = $region3
    $region8: #{tpu_custom_call.1} parent=1 // loop_exit
      _
    %1414 = vsyncpa [#allocation4], 1
    %s1415 = scalar_lea.sflag [#allocation4], 1
    %1416 = vsyncpa %s1415, 1
    %1417 = vsyncpa [#allocation6], 1
    %s1418 = scalar_lea.sflag [#allocation6], 1
    %1419 = vsyncpa %s1418, 1

</llo_original>
